<compile_context>
chip_gen: v6e
topology: v6e:2x2x1
jax: 0.10.0
libtpu: 0.0.40
codegen_flags: <defaults>
</compile_context>

<pallas_src>
import math
from dataclasses import dataclass
from functools import partial

import jax
import jax.numpy as jnp
from jax import lax
from jax.experimental import pallas as pl
from jax.experimental.pallas import tpu as pltpu


# ----------------------------- config ---------------------------------------
@dataclass
class GPTConfig:
    block_size: int = 64
    vocab_size: int = 512
    n_layer: int = 2
    n_head: int = 4
    n_embd: int = 64


# ----------------------------- in-kernel helpers ------------------------------
def _layernorm_f32(x, g, b, eps=1e-5):
    mu = jnp.mean(x, axis=-1, keepdims=True)
    var = jnp.mean(jnp.square(x - mu), axis=-1, keepdims=True)
    return (x - mu) * lax.rsqrt(var + eps) * g + b


def _gelu_tanh_f32(x):
    c = math.sqrt(2.0 / math.pi)
    return 0.5 * x * (1.0 + jnp.tanh(c * (x + 0.044715 * x * x * x)))


# ----------------------------- fused attention sub-block ---------------------
def _attn_block_kernel(x_ref, g_ref, b_ref, wqkv_ref, bqkv_ref, wpj_ref, bpj_ref,
                       o_ref, *, n_head):
    # One batch row per grid point. Block shapes: x (1, T, C), weights full.
    x = x_ref[0].astype(jnp.float32)                       # (T, C) residual input
    T, C = x.shape
    hd = C // n_head

    # LayerNorm (f32)
    h = _layernorm_f32(x, g_ref[...], b_ref[...])

    # QKV projection: bf16 operands, f32 accumulation on the MXU.
    qkv = jnp.dot(h.astype(jnp.bfloat16), wqkv_ref[...],
                  preferred_element_type=jnp.float32) + bqkv_ref[...]   # (T, 3C) f32
    qkv_bf = qkv.astype(jnp.bfloat16)

    def to_heads(base):                                    # -> (H, T, hd) bf16
        return jnp.stack(
            [qkv_bf[:, base + i * hd: base + (i + 1) * hd] for i in range(n_head)],
            axis=0)

    qh = to_heads(0)
    kh = to_heads(C)
    vh = to_heads(2 * C)

    # Head-batched score matmul (bf16 -> f32 acc), causal softmax in f32.
    scale = 1.0 / math.sqrt(hd)
    s = jnp.einsum("hqd,hkd->hqk", qh, kh,
                   preferred_element_type=jnp.float32) * scale          # (H, T, T)
    row = lax.broadcasted_iota(jnp.int32, (1, T, T), 1)
    col = lax.broadcasted_iota(jnp.int32, (1, T, T), 2)
    s = jnp.where(col <= row, s, -jnp.inf)
    m = jnp.max(s, axis=-1, keepdims=True)
    p = jnp.exp(s - m)
    denom = jnp.sum(p, axis=-1, keepdims=True)
    o = jnp.einsum("hqk,hkd->hqd", p.astype(jnp.bfloat16), vh,
                   preferred_element_type=jnp.float32)                  # (H, T, hd)
    o = o * pl.reciprocal(denom, approx=True)

    # Re-pack heads on the lane axis -> (T, C), then output proj + residual add.
    y = jnp.concatenate([o[i] for i in range(n_head)], axis=-1)
    y = jnp.dot(y.astype(jnp.bfloat16), wpj_ref[...],
                preferred_element_type=jnp.float32) + bpj_ref[...]
    o_ref[0] = (x + y).astype(o_ref.dtype)


def attn_block(x, blk, n_head):
    B, T, C = x.shape
    return pl.pallas_call(
        partial(_attn_block_kernel, n_head=n_head),
        out_shape=jax.ShapeDtypeStruct((B, T, C), x.dtype),
        grid_spec=pltpu.PrefetchScalarGridSpec(
            num_scalar_prefetch=0,
            grid=(B,),
            in_specs=[
                pl.BlockSpec((1, T, C), lambda b: (b, 0, 0)),
                pl.BlockSpec((1, C), lambda b: (0, 0)),
                pl.BlockSpec((1, C), lambda b: (0, 0)),
                pl.BlockSpec((C, 3 * C), lambda b: (0, 0)),
                pl.BlockSpec((1, 3 * C), lambda b: (0, 0)),
                pl.BlockSpec((C, C), lambda b: (0, 0)),
                pl.BlockSpec((1, C), lambda b: (0, 0)),
            ],
            out_specs=pl.BlockSpec((1, T, C), lambda b: (b, 0, 0)),
        ),
        compiler_params=pltpu.CompilerParams(dimension_semantics=("parallel",)),
    )(x, blk["ln1_g"], blk["ln1_b"], blk["attn_w"], blk["attn_b"],
      blk["attn_proj_w"], blk["attn_proj_b"])


# ----------------------------- fused MLP sub-block ----------------------------
def _mlp_block_kernel(x_ref, g_ref, b_ref, wfc_ref, bfc_ref, wpj_ref, bpj_ref, o_ref):
    x = x_ref[0].astype(jnp.float32)                       # (T, C)
    h = _layernorm_f32(x, g_ref[...], b_ref[...])
    h = jnp.dot(h.astype(jnp.bfloat16), wfc_ref[...],
                preferred_element_type=jnp.float32) + bfc_ref[...]      # (T, 4C) f32
    h = _gelu_tanh_f32(h)
    y = jnp.dot(h.astype(jnp.bfloat16), wpj_ref[...],
                preferred_element_type=jnp.float32) + bpj_ref[...]      # (T, C) f32
    o_ref[0] = (x + y).astype(o_ref.dtype)


def mlp_block(x, blk):
    B, T, C = x.shape
    F = blk["fc_w"].shape[1]
    return pl.pallas_call(
        _mlp_block_kernel,
        out_shape=jax.ShapeDtypeStruct((B, T, C), x.dtype),
        grid_spec=pltpu.PrefetchScalarGridSpec(
            num_scalar_prefetch=0,
            grid=(B,),
            in_specs=[
                pl.BlockSpec((1, T, C), lambda b: (b, 0, 0)),
                pl.BlockSpec((1, C), lambda b: (0, 0)),
                pl.BlockSpec((1, C), lambda b: (0, 0)),
                pl.BlockSpec((C, F), lambda b: (0, 0)),
                pl.BlockSpec((1, F), lambda b: (0, 0)),
                pl.BlockSpec((F, C), lambda b: (0, 0)),
                pl.BlockSpec((1, C), lambda b: (0, 0)),
            ],
            out_specs=pl.BlockSpec((1, T, C), lambda b: (b, 0, 0)),
        ),
        compiler_params=pltpu.CompilerParams(dimension_semantics=("parallel",)),
    )(x, blk["ln2_g"], blk["ln2_b"], blk["fc_w"], blk["fc_b"],
      blk["mlp_proj_w"], blk["mlp_proj_b"])


# ----------------------------- final LN + tied lm_head ------------------------
def _lm_head_kernel(x_ref, g_ref, b_ref, wte_ref, o_ref, xn_ref):
    # Grid: (batch row, vocab tile). LayerNorm computed once per row block at
    # j == 0 and cached in VMEM scratch (bf16) for all vocab tiles.
    @pl.when(pl.program_id(1) == 0)
    def _():
        x = x_ref[0].astype(jnp.float32)                   # (T, C)
        xn_ref[...] = _layernorm_f32(x, g_ref[...], b_ref[...]).astype(jnp.bfloat16)

    # logits tile = xn (T, C) @ wte_tile (tn, C)^T  -- contract on C, no host .T
    logits = lax.dot_general(xn_ref[...], wte_ref[...],
                             dimension_numbers=(((1,), (1,)), ((), ())),
                             preferred_element_type=jnp.float32)        # (T, tn)
    o_ref[0] = logits.astype(o_ref.dtype)


def _pick_vocab_tile(v):
    for t in (2048, 1024, 512, 256, 128):
        if v % t == 0 and v // t >= 2:
            return t
    return v


def lm_head(x, g, b, wte):
    B, T, C = x.shape
    V, C2 = wte.shape
    assert C2 == C
    tn = _pick_vocab_tile(V)
    return pl.pallas_call(
        _lm_head_kernel,
        out_shape=jax.ShapeDtypeStruct((B, T, V), jnp.float32),
        grid_spec=pltpu.PrefetchScalarGridSpec(
            num_scalar_prefetch=0,
            grid=(B, V // tn),
            in_specs=[
                pl.BlockSpec((1, T, C), lambda i, j: (i, 0, 0)),
                pl.BlockSpec((1, C), lambda i, j: (0, 0)),
                pl.BlockSpec((1, C), lambda i, j: (0, 0)),
                pl.BlockSpec((tn, C), lambda i, j: (j, 0)),
            ],
            out_specs=pl.BlockSpec((1, T, tn), lambda i, j: (i, 0, j)),
            scratch_shapes=[pltpu.VMEM((T, C), jnp.bfloat16)],
        ),
        compiler_params=pltpu.CompilerParams(
            dimension_semantics=("parallel", "arbitrary")),
    )(x, g, b, wte)


# ----------------------------- parameters ------------------------------------
def init_params(key, cfg: GPTConfig):
    std = 0.02
    rstd = 0.02 * (2 * cfg.n_layer) ** -0.5
    C = cfg.n_embd
    keys = jax.random.split(key, 2 + 4 * cfg.n_layer)
    it = iter(keys)

    def nrm_bf16(shape, s):
        return (s * jax.random.normal(next(it), shape, jnp.float32)).astype(jnp.bfloat16)

    params = {
        # wte is shared with lm_head (weight tying), exactly like the PyTorch model.
        "wte": nrm_bf16((cfg.vocab_size, C), std),
        "wpe": std * jax.random.normal(next(it), (cfg.block_size, C), jnp.float32),
        "lnf_g": jnp.ones((1, C), jnp.float32),
        "lnf_b": jnp.zeros((1, C), jnp.float32),
        "blocks": [],
    }
    for _ in range(cfg.n_layer):
        blk = {
            "ln1_g": jnp.ones((1, C), jnp.float32),
            "ln1_b": jnp.zeros((1, C), jnp.float32),
            "attn_w": nrm_bf16((C, 3 * C), std),
            "attn_b": jnp.zeros((1, 3 * C), jnp.float32),
            "attn_proj_w": nrm_bf16((C, C), rstd),
            "attn_proj_b": jnp.zeros((1, C), jnp.float32),
            "ln2_g": jnp.ones((1, C), jnp.float32),
            "ln2_b": jnp.zeros((1, C), jnp.float32),
            "fc_w": nrm_bf16((C, 4 * C), std),
            "fc_b": jnp.zeros((1, 4 * C), jnp.float32),
            "mlp_proj_w": nrm_bf16((4 * C, C), rstd),
            "mlp_proj_b": jnp.zeros((1, C), jnp.float32),
        }
        params["blocks"].append(blk)
    return params


# ----------------------------- forward ---------------------------------------
def gpt_forward(params, idx, cfg: GPTConfig, targets=None):
    B, T = idx.shape
    assert T <= cfg.block_size
    H = cfg.n_head

    tok_emb = jnp.take(params["wte"], idx, axis=0).astype(jnp.float32)  # (B, T, C)
    pos_emb = params["wpe"][:T]                                          # (T, C) f32
    x = tok_emb + pos_emb[None, :, :]                                    # f32 residual

    for blk in params["blocks"]:
        x = attn_block(x, blk, H)    # fused LN1 + QKV + causal attn + proj + residual
        x = mlp_block(x, blk)        # fused LN2 + FC + GELU + proj + residual

    logits = lm_head(x, params["lnf_g"], params["lnf_b"], params["wte"])  # (B, T, V)

    loss = None
    if targets is not None:
        flat = logits.reshape(B * T, cfg.vocab_size)
        tgt = targets.reshape(B * T)
        logz = jax.nn.logsumexp(flat, axis=-1)
        picked = jnp.take_along_axis(flat, tgt[:, None], axis=-1)[:, 0]
        loss = jnp.mean(logz - picked)
    return logits, loss


# ----------------------------- main -------------------------------------------
if __name__ == "__main__":
    cfg = GPTConfig(block_size=64, vocab_size=512, n_layer=2, n_head=4, n_embd=64)
    B, T = 2, 16

    key = jax.random.PRNGKey(0)
    kp, ki, kt = jax.random.split(key, 3)
    params = init_params(kp, cfg)
    idx = jax.random.randint(ki, (B, T), 0, cfg.vocab_size, dtype=jnp.int32)
    targets = jax.random.randint(kt, (B, T), 0, cfg.vocab_size, dtype=jnp.int32)

    fwd = jax.jit(lambda p, i, t: gpt_forward(p, i, cfg, targets=t))
    logits, loss = fwd(params, idx, targets)
    jax.block_until_ready((logits, loss))

    assert logits.shape == (B, T, cfg.vocab_size)
    assert logits.dtype == jnp.float32
    assert bool(jnp.isfinite(loss)) and bool(jnp.all(jnp.isfinite(logits)))
    print("KERNEL_OK")
</pallas_src>

<mosaic_0001>
module attributes {stable_mosaic.version = 11 : i64} {
  func.func @_attn_block_kernel(%arg0: i32, %arg1: memref<1x16x64xf32, #tpu.memory_space<vmem>>, %arg2: memref<1x64xf32, #tpu.memory_space<vmem>>, %arg3: memref<1x64xf32, #tpu.memory_space<vmem>>, %arg4: memref<64x192xbf16, #tpu.memory_space<vmem>>, %arg5: memref<1x192xf32, #tpu.memory_space<vmem>>, %arg6: memref<64x64xbf16, #tpu.memory_space<vmem>>, %arg7: memref<1x64xf32, #tpu.memory_space<vmem>>, %arg8: memref<1x16x64xf32, #tpu.memory_space<vmem>>) attributes {dimension_semantics = [#tpu.dimension_semantics<parallel>], iteration_bounds = array<i64: 2>, scalar_prefetch = 0 : i64, scratch_operands = 0 : i64, tpu.core_type = #tpu.core_type<tc>, window_params = [{transform_indices = @transform_0, window_bounds = array<i64: 1, 16, 64>}, {pipeline_mode = #tpu.pipeline_mode<synchronous>, transform_indices = @transform_1, window_bounds = array<i64: 1, 64>}, {pipeline_mode = #tpu.pipeline_mode<synchronous>, transform_indices = @transform_2, window_bounds = array<i64: 1, 64>}, {pipeline_mode = #tpu.pipeline_mode<synchronous>, transform_indices = @transform_3, window_bounds = array<i64: 64, 192>}, {pipeline_mode = #tpu.pipeline_mode<synchronous>, transform_indices = @transform_4, window_bounds = array<i64: 1, 192>}, {pipeline_mode = #tpu.pipeline_mode<synchronous>, transform_indices = @transform_5, window_bounds = array<i64: 64, 64>}, {pipeline_mode = #tpu.pipeline_mode<synchronous>, transform_indices = @transform_6, window_bounds = array<i64: 1, 64>}, {transform_indices = @transform_7, window_bounds = array<i64: 1, 16, 64>}]} {
    %c0 = arith.constant 0 : index
    %c0_0 = arith.constant 0 : index
    %c0_1 = arith.constant 0 : index
    %0 = vector.load %arg1[%c0, %c0_0, %c0_1] : memref<1x16x64xf32, #tpu.memory_space<vmem>>, vector<1x16x64xf32>
    %1 = vector.shape_cast %0 : vector<1x16x64xf32> to vector<16x64xf32>
    %c0_2 = arith.constant 0 : index
    %c0_3 = arith.constant 0 : index
    %2 = vector.load %arg2[%c0_2, %c0_3] : memref<1x64xf32, #tpu.memory_space<vmem>>, vector<1x64xf32>
    %c0_4 = arith.constant 0 : index
    %c0_5 = arith.constant 0 : index
    %3 = vector.load %arg3[%c0_4, %c0_5] : memref<1x64xf32, #tpu.memory_space<vmem>>, vector<1x64xf32>
    %cst = arith.constant dense<0.000000e+00> : vector<16xf32>
    %4 = vector.multi_reduction <add>, %1, %cst [1] : vector<16x64xf32> to vector<16xf32>
    %5 = vector.shape_cast %4 : vector<16xf32> to vector<16x1xf32>
    %cst_6 = arith.constant 6.400000e+01 : f32
    %6 = vector.broadcast %cst_6 : f32 to vector<16x1xf32>
    %7 = arith.divf %5, %6 : vector<16x1xf32>
    %8 = vector.broadcast %7 : vector<16x1xf32> to vector<16x64xf32>
    %9 = arith.subf %1, %8 : vector<16x64xf32>
    %10 = arith.mulf %9, %9 : vector<16x64xf32>
    %cst_7 = arith.constant dense<0.000000e+00> : vector<16xf32>
    %11 = vector.multi_reduction <add>, %10, %cst_7 [1] : vector<16x64xf32> to vector<16xf32>
    %12 = vector.shape_cast %11 : vector<16xf32> to vector<16x1xf32>
    %cst_8 = arith.constant 6.400000e+01 : f32
    %13 = vector.broadcast %cst_8 : f32 to vector<16x1xf32>
    %14 = arith.divf %12, %13 : vector<16x1xf32>
    %15 = vector.broadcast %7 : vector<16x1xf32> to vector<16x64xf32>
    %16 = arith.subf %1, %15 : vector<16x64xf32>
    %cst_9 = arith.constant 9.99999974E-6 : f32
    %17 = vector.broadcast %cst_9 : f32 to vector<16x1xf32>
    %18 = arith.addf %14, %17 : vector<16x1xf32>
    %19 = math.rsqrt %18 : vector<16x1xf32>
    %20 = vector.broadcast %19 : vector<16x1xf32> to vector<16x64xf32>
    %21 = arith.mulf %16, %20 : vector<16x64xf32>
    %22 = vector.broadcast %2 : vector<1x64xf32> to vector<16x64xf32>
    %23 = arith.mulf %21, %22 : vector<16x64xf32>
    %24 = vector.broadcast %3 : vector<1x64xf32> to vector<16x64xf32>
    %25 = arith.addf %23, %24 : vector<16x64xf32>
    %26 = arith.truncf %25 : vector<16x64xf32> to vector<16x64xbf16>
    %c0_10 = arith.constant 0 : index
    %c0_11 = arith.constant 0 : index
    %27 = vector.load %arg4[%c0_10, %c0_11] : memref<64x192xbf16, #tpu.memory_space<vmem>>, vector<64x192xbf16>
    %cst_12 = arith.constant dense<0.000000e+00> : vector<16x192xf32>
    %28 = tpu.matmul %26, %27, %cst_12 {dimension_numbers = #tpu.dot_dimension_numbers<[1], [0], [0], [1], [0, 0, 1, 1], [], []>} : vector<16x64xbf16>, vector<64x192xbf16>, vector<16x192xf32> -> vector<16x192xf32>
    %c0_13 = arith.constant 0 : index
    %c0_14 = arith.constant 0 : index
    %29 = vector.load %arg5[%c0_13, %c0_14] : memref<1x192xf32, #tpu.memory_space<vmem>>, vector<1x192xf32>
    %30 = vector.broadcast %29 : vector<1x192xf32> to vector<16x192xf32>
    %31 = arith.addf %28, %30 : vector<16x192xf32>
    %32 = arith.truncf %31 : vector<16x192xf32> to vector<16x192xbf16>
    %33 = vector.extract_strided_slice %32 {offsets = [0, 0], sizes = [16, 16], strides = [1, 1]} : vector<16x192xbf16> to vector<16x16xbf16>
    %34 = vector.extract_strided_slice %32 {offsets = [0, 16], sizes = [16, 16], strides = [1, 1]} : vector<16x192xbf16> to vector<16x16xbf16>
    %35 = vector.extract_strided_slice %32 {offsets = [0, 32], sizes = [16, 16], strides = [1, 1]} : vector<16x192xbf16> to vector<16x16xbf16>
    %36 = vector.extract_strided_slice %32 {offsets = [0, 48], sizes = [16, 16], strides = [1, 1]} : vector<16x192xbf16> to vector<16x16xbf16>
    %37 = vector.shape_cast %33 : vector<16x16xbf16> to vector<1x16x16xbf16>
    %38 = vector.shape_cast %34 : vector<16x16xbf16> to vector<1x16x16xbf16>
    %39 = vector.shape_cast %35 : vector<16x16xbf16> to vector<1x16x16xbf16>
    %40 = vector.shape_cast %36 : vector<16x16xbf16> to vector<1x16x16xbf16>
    %41 = tpu.concatenate %37, %38, %39, %40 in 0 : vector<1x16x16xbf16>, vector<1x16x16xbf16>, vector<1x16x16xbf16>, vector<1x16x16xbf16> -> vector<4x16x16xbf16>
    %42 = vector.extract_strided_slice %32 {offsets = [0, 64], sizes = [16, 16], strides = [1, 1]} : vector<16x192xbf16> to vector<16x16xbf16>
    %43 = vector.extract_strided_slice %32 {offsets = [0, 80], sizes = [16, 16], strides = [1, 1]} : vector<16x192xbf16> to vector<16x16xbf16>
    %44 = vector.extract_strided_slice %32 {offsets = [0, 96], sizes = [16, 16], strides = [1, 1]} : vector<16x192xbf16> to vector<16x16xbf16>
    %45 = vector.extract_strided_slice %32 {offsets = [0, 112], sizes = [16, 16], strides = [1, 1]} : vector<16x192xbf16> to vector<16x16xbf16>
    %46 = vector.shape_cast %42 : vector<16x16xbf16> to vector<1x16x16xbf16>
    %47 = vector.shape_cast %43 : vector<16x16xbf16> to vector<1x16x16xbf16>
    %48 = vector.shape_cast %44 : vector<16x16xbf16> to vector<1x16x16xbf16>
    %49 = vector.shape_cast %45 : vector<16x16xbf16> to vector<1x16x16xbf16>
    %50 = tpu.concatenate %46, %47, %48, %49 in 0 : vector<1x16x16xbf16>, vector<1x16x16xbf16>, vector<1x16x16xbf16>, vector<1x16x16xbf16> -> vector<4x16x16xbf16>
    %51 = vector.extract_strided_slice %32 {offsets = [0, 128], sizes = [16, 16], strides = [1, 1]} : vector<16x192xbf16> to vector<16x16xbf16>
    %52 = vector.extract_strided_slice %32 {offsets = [0, 144], sizes = [16, 16], strides = [1, 1]} : vector<16x192xbf16> to vector<16x16xbf16>
    %53 = vector.extract_strided_slice %32 {offsets = [0, 160], sizes = [16, 16], strides = [1, 1]} : vector<16x192xbf16> to vector<16x16xbf16>
    %54 = vector.extract_strided_slice %32 {offsets = [0, 176], sizes = [16, 16], strides = [1, 1]} : vector<16x192xbf16> to vector<16x16xbf16>
    %55 = vector.shape_cast %51 : vector<16x16xbf16> to vector<1x16x16xbf16>
    %56 = vector.shape_cast %52 : vector<16x16xbf16> to vector<1x16x16xbf16>
    %57 = vector.shape_cast %53 : vector<16x16xbf16> to vector<1x16x16xbf16>
    %58 = vector.shape_cast %54 : vector<16x16xbf16> to vector<1x16x16xbf16>
    %59 = tpu.concatenate %55, %56, %57, %58 in 0 : vector<1x16x16xbf16>, vector<1x16x16xbf16>, vector<1x16x16xbf16>, vector<1x16x16xbf16> -> vector<4x16x16xbf16>
    "tpu.trace_start"() <{level = 10 : i32, message = "hqd,hkd->hqk"}> : () -> ()
    %cst_15 = arith.constant dense<0.000000e+00> : vector<4x16x16xf32>
    %60 = tpu.matmul %41, %50, %cst_15 {dimension_numbers = #tpu.dot_dimension_numbers<[2], [2], [1], [1], [0, 0, 0, 1, 1, 1], [0], [0]>} : vector<4x16x16xbf16>, vector<4x16x16xbf16>, vector<4x16x16xf32> -> vector<4x16x16xf32>
    "tpu.trace_stop"() : () -> ()
    %cst_16 = arith.constant 2.500000e-01 : f32
    %61 = vector.broadcast %cst_16 : f32 to vector<4x16x16xf32>
    %62 = arith.mulf %60, %61 : vector<4x16x16xf32>
    %63 = tpu.iota {dimensions = array<i32: 1>} : vector<1x16x16xi32>
    %64 = tpu.iota {dimensions = array<i32: 2>} : vector<1x16x16xi32>
    %65 = arith.cmpi sle, %64, %63 : vector<1x16x16xi32>
    %cst_17 = arith.constant 0xFF800000 : f32
    %66 = vector.shape_cast %65 : vector<1x16x16xi1> to vector<1x16x16xi1>
    %67 = vector.broadcast %66 : vector<1x16x16xi1> to vector<4x16x16xi1>
    %68 = vector.broadcast %cst_17 : f32 to vector<4x16x16xf32>
    %69 = arith.select %67, %62, %68 : vector<4x16x16xi1>, vector<4x16x16xf32>
    %cst_18 = arith.constant dense<0xFF800000> : vector<4x16xf32>
    %70 = vector.multi_reduction <maximumf>, %69, %cst_18 [2] : vector<4x16x16xf32> to vector<4x16xf32>
    %71 = vector.shape_cast %70 : vector<4x16xf32> to vector<4x16x1xf32>
    %72 = vector.broadcast %71 : vector<4x16x1xf32> to vector<4x16x16xf32>
    %73 = arith.subf %69, %72 : vector<4x16x16xf32>
    %74 = math.exp %73 : vector<4x16x16xf32>
    %cst_19 = arith.constant dense<0.000000e+00> : vector<4x16xf32>
    %75 = vector.multi_reduction <add>, %74, %cst_19 [2] : vector<4x16x16xf32> to vector<4x16xf32>
    %76 = vector.shape_cast %75 : vector<4x16xf32> to vector<4x16x1xf32>
    %77 = arith.truncf %74 : vector<4x16x16xf32> to vector<4x16x16xbf16>
    "tpu.trace_start"() <{level = 10 : i32, message = "hqk,hkd->hqd"}> : () -> ()
    %cst_20 = arith.constant dense<0.000000e+00> : vector<4x16x16xf32>
    %78 = tpu.matmul %77, %59, %cst_20 {dimension_numbers = #tpu.dot_dimension_numbers<[2], [1], [1], [2], [0, 0, 0, 1, 1, 2], [0], [0]>} : vector<4x16x16xbf16>, vector<4x16x16xbf16>, vector<4x16x16xf32> -> vector<4x16x16xf32>
    "tpu.trace_stop"() : () -> ()
    %79 = tpu.reciprocal %76 {approx = true} : vector<4x16x1xf32> -> vector<4x16x1xf32>
    %80 = vector.broadcast %79 : vector<4x16x1xf32> to vector<4x16x16xf32>
    %81 = arith.mulf %78, %80 : vector<4x16x16xf32>
    %82 = vector.extract_strided_slice %81 {offsets = [0, 0, 0], sizes = [1, 16, 16], strides = [1, 1, 1]} : vector<4x16x16xf32> to vector<1x16x16xf32>
    %83 = vector.shape_cast %82 : vector<1x16x16xf32> to vector<16x16xf32>
    %84 = vector.extract_strided_slice %81 {offsets = [1, 0, 0], sizes = [1, 16, 16], strides = [1, 1, 1]} : vector<4x16x16xf32> to vector<1x16x16xf32>
    %85 = vector.shape_cast %84 : vector<1x16x16xf32> to vector<16x16xf32>
    %86 = vector.extract_strided_slice %81 {offsets = [2, 0, 0], sizes = [1, 16, 16], strides = [1, 1, 1]} : vector<4x16x16xf32> to vector<1x16x16xf32>
    %87 = vector.shape_cast %86 : vector<1x16x16xf32> to vector<16x16xf32>
    %88 = vector.extract_strided_slice %81 {offsets = [3, 0, 0], sizes = [1, 16, 16], strides = [1, 1, 1]} : vector<4x16x16xf32> to vector<1x16x16xf32>
    %89 = vector.shape_cast %88 : vector<1x16x16xf32> to vector<16x16xf32>
    %90 = tpu.concatenate %83, %85, %87, %89 in 1 : vector<16x16xf32>, vector<16x16xf32>, vector<16x16xf32>, vector<16x16xf32> -> vector<16x64xf32>
    %91 = arith.truncf %90 : vector<16x64xf32> to vector<16x64xbf16>
    %c0_21 = arith.constant 0 : index
    %c0_22 = arith.constant 0 : index
    %92 = vector.load %arg6[%c0_21, %c0_22] : memref<64x64xbf16, #tpu.memory_space<vmem>>, vector<64x64xbf16>
    %cst_23 = arith.constant dense<0.000000e+00> : vector<16x64xf32>
    %93 = tpu.matmul %91, %92, %cst_23 {dimension_numbers = #tpu.dot_dimension_numbers<[1], [0], [0], [1], [0, 0, 1, 1], [], []>} : vector<16x64xbf16>, vector<64x64xbf16>, vector<16x64xf32> -> vector<16x64xf32>
    %c0_24 = arith.constant 0 : index
    %c0_25 = arith.constant 0 : index
    %94 = vector.load %arg7[%c0_24, %c0_25] : memref<1x64xf32, #tpu.memory_space<vmem>>, vector<1x64xf32>
    %95 = vector.broadcast %94 : vector<1x64xf32> to vector<16x64xf32>
    %96 = arith.addf %93, %95 : vector<16x64xf32>
    %97 = arith.addf %1, %96 : vector<16x64xf32>
    %c0_26 = arith.constant 0 : index
    %c0_27 = arith.constant 0 : index
    %c0_28 = arith.constant 0 : index
    %98 = vector.load %arg8[%c0_26, %c0_27, %c0_28] : memref<1x16x64xf32, #tpu.memory_space<vmem>>, vector<1x16x64xf32>
    %99 = vector.shape_cast %98 : vector<1x16x64xf32> to vector<16x64xf32>
    %100 = vector.shape_cast %97 : vector<16x64xf32> to vector<1x16x64xf32>
    tpu.vector_store %arg8[%c0_26, %c0_27, %c0_28], %100 {strides = array<i32>} : memref<1x16x64xf32, #tpu.memory_space<vmem>>, vector<1x16x64xf32>,
    return
  }
  func.func @transform_0(%arg0: i32) -> (i32, i32, i32) {
    %c0_i32 = arith.constant 0 : i32
    %c0_i32_0 = arith.constant 0 : i32
    %c0_i32_1 = arith.constant 0 : i32
    return %arg0, %c0_i32, %c0_i32_0 : i32, i32, i32
  }
  func.func @transform_1(%arg0: i32) -> (i32, i32) {
    %c0_i32 = arith.constant 0 : i32
    %c0_i32_0 = arith.constant 0 : i32
    %c0_i32_1 = arith.constant 0 : i32
    return %c0_i32, %c0_i32_0 : i32, i32
  }
  func.func @transform_2(%arg0: i32) -> (i32, i32) {
    %c0_i32 = arith.constant 0 : i32
    %c0_i32_0 = arith.constant 0 : i32
    %c0_i32_1 = arith.constant 0 : i32
    return %c0_i32, %c0_i32_0 : i32, i32
  }
  func.func @transform_3(%arg0: i32) -> (i32, i32) {
    %c0_i32 = arith.constant 0 : i32
    %c0_i32_0 = arith.constant 0 : i32
    %c0_i32_1 = arith.constant 0 : i32
    return %c0_i32, %c0_i32_0 : i32, i32
  }
  func.func @transform_4(%arg0: i32) -> (i32, i32) {
    %c0_i32 = arith.constant 0 : i32
    %c0_i32_0 = arith.constant 0 : i32
    %c0_i32_1 = arith.constant 0 : i32
    return %c0_i32, %c0_i32_0 : i32, i32
  }
  func.func @transform_5(%arg0: i32) -> (i32, i32) {
    %c0_i32 = arith.constant 0 : i32
    %c0_i32_0 = arith.constant 0 : i32
    %c0_i32_1 = arith.constant 0 : i32
    return %c0_i32, %c0_i32_0 : i32, i32
  }
  func.func @transform_6(%arg0: i32) -> (i32, i32) {
    %c0_i32 = arith.constant 0 : i32
    %c0_i32_0 = arith.constant 0 : i32
    %c0_i32_1 = arith.constant 0 : i32
    return %c0_i32, %c0_i32_0 : i32, i32
  }
  func.func @transform_7(%arg0: i32) -> (i32, i32, i32) {
    %c0_i32 = arith.constant 0 : i32
    %c0_i32_0 = arith.constant 0 : i32
    %c0_i32_1 = arith.constant 0 : i32
    return %arg0, %c0_i32, %c0_i32_0 : i32, i32, i32
  }
}

module attributes {stable_mosaic.version = 11 : i64} {
  func.func @_lm_head_kernel(%arg0: i32, %arg1: i32, %arg2: memref<1x16x64xf32, #tpu.memory_space<vmem>>, %arg3: memref<1x64xf32, #tpu.memory_space<vmem>>, %arg4: memref<1x64xf32, #tpu.memory_space<vmem>>, %arg5: memref<256x64xbf16, #tpu.memory_space<vmem>>, %arg6: memref<1x16x256xf32, #tpu.memory_space<vmem>>, %arg7: memref<16x64xbf16, #tpu.memory_space<vmem>>) attributes {dimension_semantics = [#tpu.dimension_semantics<parallel>, #tpu.dimension_semantics<arbitrary>], iteration_bounds = array<i64: 2, 2>, scalar_prefetch = 0 : i64, scratch_operands = 1 : i64, tpu.core_type = #tpu.core_type<tc>, window_params = [{transform_indices = @transform_0, window_bounds = array<i64: 1, 16, 64>}, {pipeline_mode = #tpu.pipeline_mode<synchronous>, transform_indices = @transform_1, window_bounds = array<i64: 1, 64>}, {pipeline_mode = #tpu.pipeline_mode<synchronous>, transform_indices = @transform_2, window_bounds = array<i64: 1, 64>}, {transform_indices = @transform_3, window_bounds = array<i64: 256, 64>}, {transform_indices = @transform_4, window_bounds = array<i64: 1, 16, 256>}]} {
    %c0_i32 = arith.constant 0 : i32
    %0 = arith.cmpi eq, %arg1, %c0_i32 : i32
    %1 = arith.extui %0 : i1 to i32
    %c0_i32_0 = arith.constant 0 : i32
    %2 = arith.cmpi ne, %1, %c0_i32_0 : i32
    scf.if %2 {
      %c0_7 = arith.constant 0 : index
      %c0_8 = arith.constant 0 : index
      %c0_9 = arith.constant 0 : index
      %9 = vector.load %arg2[%c0_7, %c0_8, %c0_9] : memref<1x16x64xf32, #tpu.memory_space<vmem>>, vector<1x16x64xf32>
      %10 = vector.shape_cast %9 : vector<1x16x64xf32> to vector<16x64xf32>
      %c0_10 = arith.constant 0 : index
      %c0_11 = arith.constant 0 : index
      %11 = vector.load %arg3[%c0_10, %c0_11] : memref<1x64xf32, #tpu.memory_space<vmem>>, vector<1x64xf32>
      %c0_12 = arith.constant 0 : index
      %c0_13 = arith.constant 0 : index
      %12 = vector.load %arg4[%c0_12, %c0_13] : memref<1x64xf32, #tpu.memory_space<vmem>>, vector<1x64xf32>
      %cst_14 = arith.constant dense<0.000000e+00> : vector<16xf32>
      %13 = vector.multi_reduction <add>, %10, %cst_14 [1] : vector<16x64xf32> to vector<16xf32>
      %14 = vector.shape_cast %13 : vector<16xf32> to vector<16x1xf32>
      %cst_15 = arith.constant 6.400000e+01 : f32
      %15 = vector.broadcast %cst_15 : f32 to vector<16x1xf32>
      %16 = arith.divf %14, %15 : vector<16x1xf32>
      %17 = vector.broadcast %16 : vector<16x1xf32> to vector<16x64xf32>
      %18 = arith.subf %10, %17 : vector<16x64xf32>
      %19 = arith.mulf %18, %18 : vector<16x64xf32>
      %cst_16 = arith.constant dense<0.000000e+00> : vector<16xf32>
      %20 = vector.multi_reduction <add>, %19, %cst_16 [1] : vector<16x64xf32> to vector<16xf32>
      %21 = vector.shape_cast %20 : vector<16xf32> to vector<16x1xf32>
      %cst_17 = arith.constant 6.400000e+01 : f32
      %22 = vector.broadcast %cst_17 : f32 to vector<16x1xf32>
      %23 = arith.divf %21, %22 : vector<16x1xf32>
      %24 = vector.broadcast %16 : vector<16x1xf32> to vector<16x64xf32>
      %25 = arith.subf %10, %24 : vector<16x64xf32>
      %cst_18 = arith.constant 9.99999974E-6 : f32
      %26 = vector.broadcast %cst_18 : f32 to vector<16x1xf32>
      %27 = arith.addf %23, %26 : vector<16x1xf32>
      %28 = math.rsqrt %27 : vector<16x1xf32>
      %29 = vector.broadcast %28 : vector<16x1xf32> to vector<16x64xf32>
      %30 = arith.mulf %25, %29 : vector<16x64xf32>
      %31 = vector.broadcast %11 : vector<1x64xf32> to vector<16x64xf32>
      %32 = arith.mulf %30, %31 : vector<16x64xf32>
      %33 = vector.broadcast %12 : vector<1x64xf32> to vector<16x64xf32>
      %34 = arith.addf %32, %33 : vector<16x64xf32>
      %35 = arith.truncf %34 : vector<16x64xf32> to vector<16x64xbf16>
      %c0_19 = arith.constant 0 : index
      %c0_20 = arith.constant 0 : index
      %36 = vector.load %arg7[%c0_19, %c0_20] : memref<16x64xbf16, #tpu.memory_space<vmem>>, vector<16x64xbf16>
      tpu.vector_store %arg7[%c0_19, %c0_20], %35 {strides = array<i32>} : memref<16x64xbf16, #tpu.memory_space<vmem>>, vector<16x64xbf16>,
    } else {
    }
    %c0 = arith.constant 0 : index
    %c0_1 = arith.constant 0 : index
    %3 = vector.load %arg7[%c0, %c0_1] : memref<16x64xbf16, #tpu.memory_space<vmem>>, vector<16x64xbf16>
    %c0_2 = arith.constant 0 : index
    %c0_3 = arith.constant 0 : index
    %4 = vector.load %arg5[%c0_2, %c0_3] : memref<256x64xbf16, #tpu.memory_space<vmem>>, vector<256x64xbf16>
    %cst = arith.constant dense<0.000000e+00> : vector<16x256xf32>
    %5 = tpu.matmul %3, %4, %cst {dimension_numbers = #tpu.dot_dimension_numbers<[1], [1], [0], [0], [0, 0, 1, 0], [], []>} : vector<16x64xbf16>, vector<256x64xbf16>, vector<16x256xf32> -> vector<16x256xf32>
    %c0_4 = arith.constant 0 : index
    %c0_5 = arith.constant 0 : index
    %c0_6 = arith.constant 0 : index
    %6 = vector.load %arg6[%c0_4, %c0_5, %c0_6] : memref<1x16x256xf32, #tpu.memory_space<vmem>>, vector<1x16x256xf32>
    %7 = vector.shape_cast %6 : vector<1x16x256xf32> to vector<16x256xf32>
    %8 = vector.shape_cast %5 : vector<16x256xf32> to vector<1x16x256xf32>
    tpu.vector_store %arg6[%c0_4, %c0_5, %c0_6], %8 {strides = array<i32>} : memref<1x16x256xf32, #tpu.memory_space<vmem>>, vector<1x16x256xf32>,
    return
  }
  func.func @transform_0(%arg0: i32, %arg1: i32) -> (i32, i32, i32) {
    %c0_i32 = arith.constant 0 : i32
    %c0_i32_0 = arith.constant 0 : i32
    %c0_i32_1 = arith.constant 0 : i32
    return %arg0, %c0_i32, %c0_i32_0 : i32, i32, i32
  }
  func.func @transform_1(%arg0: i32, %arg1: i32) -> (i32, i32) {
    %c0_i32 = arith.constant 0 : i32
    %c0_i32_0 = arith.constant 0 : i32
    %c0_i32_1 = arith.constant 0 : i32
    return %c0_i32, %c0_i32_0 : i32, i32
  }
  func.func @transform_2(%arg0: i32, %arg1: i32) -> (i32, i32) {
    %c0_i32 = arith.constant 0 : i32
    %c0_i32_0 = arith.constant 0 : i32
    %c0_i32_1 = arith.constant 0 : i32
    return %c0_i32, %c0_i32_0 : i32, i32
  }
  func.func @transform_3(%arg0: i32, %arg1: i32) -> (i32, i32) {
    %c0_i32 = arith.constant 0 : i32
    %c0_i32_0 = arith.constant 0 : i32
    return %arg1, %c0_i32 : i32, i32
  }
  func.func @transform_4(%arg0: i32, %arg1: i32) -> (i32, i32, i32) {
    %c0_i32 = arith.constant 0 : i32
    %c0_i32_0 = arith.constant 0 : i32
    return %arg0, %c0_i32, %arg1 : i32, i32, i32
  }
}

module attributes {stable_mosaic.version = 11 : i64} {
  func.func @_mlp_block_kernel(%arg0: i32, %arg1: memref<1x16x64xf32, #tpu.memory_space<vmem>>, %arg2: memref<1x64xf32, #tpu.memory_space<vmem>>, %arg3: memref<1x64xf32, #tpu.memory_space<vmem>>, %arg4: memref<64x256xbf16, #tpu.memory_space<vmem>>, %arg5: memref<1x256xf32, #tpu.memory_space<vmem>>, %arg6: memref<256x64xbf16, #tpu.memory_space<vmem>>, %arg7: memref<1x64xf32, #tpu.memory_space<vmem>>, %arg8: memref<1x16x64xf32, #tpu.memory_space<vmem>>) attributes {dimension_semantics = [#tpu.dimension_semantics<parallel>], iteration_bounds = array<i64: 2>, scalar_prefetch = 0 : i64, scratch_operands = 0 : i64, tpu.core_type = #tpu.core_type<tc>, window_params = [{transform_indices = @transform_0, window_bounds = array<i64: 1, 16, 64>}, {pipeline_mode = #tpu.pipeline_mode<synchronous>, transform_indices = @transform_1, window_bounds = array<i64: 1, 64>}, {pipeline_mode = #tpu.pipeline_mode<synchronous>, transform_indices = @transform_2, window_bounds = array<i64: 1, 64>}, {pipeline_mode = #tpu.pipeline_mode<synchronous>, transform_indices = @transform_3, window_bounds = array<i64: 64, 256>}, {pipeline_mode = #tpu.pipeline_mode<synchronous>, transform_indices = @transform_4, window_bounds = array<i64: 1, 256>}, {pipeline_mode = #tpu.pipeline_mode<synchronous>, transform_indices = @transform_5, window_bounds = array<i64: 256, 64>}, {pipeline_mode = #tpu.pipeline_mode<synchronous>, transform_indices = @transform_6, window_bounds = array<i64: 1, 64>}, {transform_indices = @transform_7, window_bounds = array<i64: 1, 16, 64>}]} {
    %c0 = arith.constant 0 : index
    %c0_0 = arith.constant 0 : index
    %c0_1 = arith.constant 0 : index
    %0 = vector.load %arg1[%c0, %c0_0, %c0_1] : memref<1x16x64xf32, #tpu.memory_space<vmem>>, vector<1x16x64xf32>
    %1 = vector.shape_cast %0 : vector<1x16x64xf32> to vector<16x64xf32>
    %c0_2 = arith.constant 0 : index
    %c0_3 = arith.constant 0 : index
    %2 = vector.load %arg2[%c0_2, %c0_3] : memref<1x64xf32, #tpu.memory_space<vmem>>, vector<1x64xf32>
    %c0_4 = arith.constant 0 : index
    %c0_5 = arith.constant 0 : index
    %3 = vector.load %arg3[%c0_4, %c0_5] : memref<1x64xf32, #tpu.memory_space<vmem>>, vector<1x64xf32>
    %cst = arith.constant dense<0.000000e+00> : vector<16xf32>
    %4 = vector.multi_reduction <add>, %1, %cst [1] : vector<16x64xf32> to vector<16xf32>
    %5 = vector.shape_cast %4 : vector<16xf32> to vector<16x1xf32>
    %cst_6 = arith.constant 6.400000e+01 : f32
    %6 = vector.broadcast %cst_6 : f32 to vector<16x1xf32>
    %7 = arith.divf %5, %6 : vector<16x1xf32>
    %8 = vector.broadcast %7 : vector<16x1xf32> to vector<16x64xf32>
    %9 = arith.subf %1, %8 : vector<16x64xf32>
    %10 = arith.mulf %9, %9 : vector<16x64xf32>
    %cst_7 = arith.constant dense<0.000000e+00> : vector<16xf32>
    %11 = vector.multi_reduction <add>, %10, %cst_7 [1] : vector<16x64xf32> to vector<16xf32>
    %12 = vector.shape_cast %11 : vector<16xf32> to vector<16x1xf32>
    %cst_8 = arith.constant 6.400000e+01 : f32
    %13 = vector.broadcast %cst_8 : f32 to vector<16x1xf32>
    %14 = arith.divf %12, %13 : vector<16x1xf32>
    %15 = vector.broadcast %7 : vector<16x1xf32> to vector<16x64xf32>
    %16 = arith.subf %1, %15 : vector<16x64xf32>
    %cst_9 = arith.constant 9.99999974E-6 : f32
    %17 = vector.broadcast %cst_9 : f32 to vector<16x1xf32>
    %18 = arith.addf %14, %17 : vector<16x1xf32>
    %19 = math.rsqrt %18 : vector<16x1xf32>
    %20 = vector.broadcast %19 : vector<16x1xf32> to vector<16x64xf32>
    %21 = arith.mulf %16, %20 : vector<16x64xf32>
    %22 = vector.broadcast %2 : vector<1x64xf32> to vector<16x64xf32>
    %23 = arith.mulf %21, %22 : vector<16x64xf32>
    %24 = vector.broadcast %3 : vector<1x64xf32> to vector<16x64xf32>
    %25 = arith.addf %23, %24 : vector<16x64xf32>
    %26 = arith.truncf %25 : vector<16x64xf32> to vector<16x64xbf16>
    %c0_10 = arith.constant 0 : index
    %c0_11 = arith.constant 0 : index
    %27 = vector.load %arg4[%c0_10, %c0_11] : memref<64x256xbf16, #tpu.memory_space<vmem>>, vector<64x256xbf16>
    %cst_12 = arith.constant dense<0.000000e+00> : vector<16x256xf32>
    %28 = tpu.matmul %26, %27, %cst_12 {dimension_numbers = #tpu.dot_dimension_numbers<[1], [0], [0], [1], [0, 0, 1, 1], [], []>} : vector<16x64xbf16>, vector<64x256xbf16>, vector<16x256xf32> -> vector<16x256xf32>
    %c0_13 = arith.constant 0 : index
    %c0_14 = arith.constant 0 : index
    %29 = vector.load %arg5[%c0_13, %c0_14] : memref<1x256xf32, #tpu.memory_space<vmem>>, vector<1x256xf32>
    %30 = vector.broadcast %29 : vector<1x256xf32> to vector<16x256xf32>
    %31 = arith.addf %28, %30 : vector<16x256xf32>
    %cst_15 = arith.constant 5.000000e-01 : f32
    %32 = vector.broadcast %cst_15 : f32 to vector<16x256xf32>
    %33 = arith.mulf %32, %31 : vector<16x256xf32>
    %cst_16 = arith.constant 4.471500e-02 : f32
    %34 = vector.broadcast %cst_16 : f32 to vector<16x256xf32>
    %35 = arith.mulf %34, %31 : vector<16x256xf32>
    %36 = arith.mulf %35, %31 : vector<16x256xf32>
    %37 = arith.mulf %36, %31 : vector<16x256xf32>
    %38 = arith.addf %31, %37 : vector<16x256xf32>
    %cst_17 = arith.constant 0.797884583 : f32
    %39 = vector.broadcast %cst_17 : f32 to vector<16x256xf32>
    %40 = arith.mulf %39, %38 : vector<16x256xf32>
    %41 = math.tanh %40 : vector<16x256xf32>
    %cst_18 = arith.constant 1.000000e+00 : f32
    %42 = vector.broadcast %cst_18 : f32 to vector<16x256xf32>
    %43 = arith.addf %42, %41 : vector<16x256xf32>
    %44 = arith.mulf %33, %43 : vector<16x256xf32>
    %45 = arith.truncf %44 : vector<16x256xf32> to vector<16x256xbf16>
    %c0_19 = arith.constant 0 : index
    %c0_20 = arith.constant 0 : index
    %46 = vector.load %arg6[%c0_19, %c0_20] : memref<256x64xbf16, #tpu.memory_space<vmem>>, vector<256x64xbf16>
    %cst_21 = arith.constant dense<0.000000e+00> : vector<16x64xf32>
    %47 = tpu.matmul %45, %46, %cst_21 {dimension_numbers = #tpu.dot_dimension_numbers<[1], [0], [0], [1], [0, 0, 1, 1], [], []>} : vector<16x256xbf16>, vector<256x64xbf16>, vector<16x64xf32> -> vector<16x64xf32>
    %c0_22 = arith.constant 0 : index
    %c0_23 = arith.constant 0 : index
    %48 = vector.load %arg7[%c0_22, %c0_23] : memref<1x64xf32, #tpu.memory_space<vmem>>, vector<1x64xf32>
    %49 = vector.broadcast %48 : vector<1x64xf32> to vector<16x64xf32>
    %50 = arith.addf %47, %49 : vector<16x64xf32>
    %51 = arith.addf %1, %50 : vector<16x64xf32>
    %c0_24 = arith.constant 0 : index
    %c0_25 = arith.constant 0 : index
    %c0_26 = arith.constant 0 : index
    %52 = vector.load %arg8[%c0_24, %c0_25, %c0_26] : memref<1x16x64xf32, #tpu.memory_space<vmem>>, vector<1x16x64xf32>
    %53 = vector.shape_cast %52 : vector<1x16x64xf32> to vector<16x64xf32>
    %54 = vector.shape_cast %51 : vector<16x64xf32> to vector<1x16x64xf32>
    tpu.vector_store %arg8[%c0_24, %c0_25, %c0_26], %54 {strides = array<i32>} : memref<1x16x64xf32, #tpu.memory_space<vmem>>, vector<1x16x64xf32>,
    return
  }
  func.func @transform_0(%arg0: i32) -> (i32, i32, i32) {
    %c0_i32 = arith.constant 0 : i32
    %c0_i32_0 = arith.constant 0 : i32
    %c0_i32_1 = arith.constant 0 : i32
    return %arg0, %c0_i32, %c0_i32_0 : i32, i32, i32
  }
  func.func @transform_1(%arg0: i32) -> (i32, i32) {
    %c0_i32 = arith.constant 0 : i32
    %c0_i32_0 = arith.constant 0 : i32
    %c0_i32_1 = arith.constant 0 : i32
    return %c0_i32, %c0_i32_0 : i32, i32
  }
  func.func @transform_2(%arg0: i32) -> (i32, i32) {
    %c0_i32 = arith.constant 0 : i32
    %c0_i32_0 = arith.constant 0 : i32
    %c0_i32_1 = arith.constant 0 : i32
    return %c0_i32, %c0_i32_0 : i32, i32
  }
  func.func @transform_3(%arg0: i32) -> (i32, i32) {
    %c0_i32 = arith.constant 0 : i32
    %c0_i32_0 = arith.constant 0 : i32
    %c0_i32_1 = arith.constant 0 : i32
    return %c0_i32, %c0_i32_0 : i32, i32
  }
  func.func @transform_4(%arg0: i32) -> (i32, i32) {
    %c0_i32 = arith.constant 0 : i32
    %c0_i32_0 = arith.constant 0 : i32
    %c0_i32_1 = arith.constant 0 : i32
    return %c0_i32, %c0_i32_0 : i32, i32
  }
  func.func @transform_5(%arg0: i32) -> (i32, i32) {
    %c0_i32 = arith.constant 0 : i32
    %c0_i32_0 = arith.constant 0 : i32
    %c0_i32_1 = arith.constant 0 : i32
    return %c0_i32, %c0_i32_0 : i32, i32
  }
  func.func @transform_6(%arg0: i32) -> (i32, i32) {
    %c0_i32 = arith.constant 0 : i32
    %c0_i32_0 = arith.constant 0 : i32
    %c0_i32_1 = arith.constant 0 : i32
    return %c0_i32, %c0_i32_0 : i32, i32
  }
  func.func @transform_7(%arg0: i32) -> (i32, i32, i32) {
    %c0_i32 = arith.constant 0 : i32
    %c0_i32_0 = arith.constant 0 : i32
    %c0_i32_1 = arith.constant 0 : i32
    return %arg0, %c0_i32, %c0_i32_0 : i32, i32, i32
  }
}

</mosaic_0001>

<llo_original>
// kernel: _lambda_.6
$region0: #{_lambda_.6}
  #allocation0 [shape = 'u32[]', space=smem, size = 0x4, offset = 0x4, fixed_abs, tag = 'smem constant byte address 0x4 - core index']
  #allocation1 [shape = 'u32[144,128]{1,0:T(1,128)}', space=vmem, size = 0x12000, scoped, tag = 'internal scratch']
  %s0 = inlined_call_operand.vmem [shape: f32[2,16,64], index: 0, kind: input, shape index: {}]
  %s1 = inlined_call_operand.vmem [shape: f32[1,64], index: 1, kind: input, shape index: {}]
  %s2 = inlined_call_operand.vmem [shape: f32[1,64], index: 2, kind: input, shape index: {}]
  %s3 = inlined_call_operand.vmem [shape: bf16[64,256], index: 3, kind: input, shape index: {}]
  %s4 = inlined_call_operand.vmem [shape: f32[1,256], index: 4, kind: input, shape index: {}]
  %s5 = inlined_call_operand.vmem [shape: bf16[256,64], index: 5, kind: input, shape index: {}]
  %s6 = inlined_call_operand.vmem [shape: f32[1,64], index: 6, kind: input, shape index: {}]
  %s7 = inlined_call_operand.vmem [shape: f32[2,16,64], index: 7, kind: output, shape index: {}]
  %s8 = sld [smem:[#allocation0]]
  $region61: #{_lambda_.6} parent=0
    _
  %s10 = ssub.s32 1, %s8
  %s11 = scalar_select 0, %s10, %s8
  loop: start=0, step=1, limit=4
  $region2: #{_lambda_.6} parent=0 // loop_pre_header
    _
  $region3: #{_lambda_.6} parent=0 // loop_header
    %s13 = sphi 0, %s17
    %p14 = scmp.ge.s32.totalorder %s13, 4
    %s23 = sphi 0, %s25
    %s26 = sphi 0, %s23
    %s27 = sphi 0, %s26
    %s43 = sphi 0, %s27
    %s47 = sphi 0, %s47
    %s49 = sphi 0, %s47
    %s50 = sphi 0, %s49
    %s64 = sphi 0, %s50
    %s68 = sphi 0, %s68
    %s70 = sphi 0, %s68
    %s71 = sphi 0, %s70
    %s85 = sphi 0, %s71
    %s89 = sphi 0, %s89
    %s91 = sphi 0, %s89
    %s92 = sphi 0, %s91
    %s106 = sphi 0, %s92
    %s110 = sphi 0, %s110
    %s112 = sphi 0, %s110
    %s113 = sphi 0, %s112
    %s127 = sphi 0, %s113
    %s131 = sphi 0, %s131
    %s133 = sphi 0, %s131
    %s134 = sphi 0, %s133
    %s148 = sphi 0, %s134
    %s152 = sphi 0, %s152
    %s154 = sphi 0, %s152
    %s155 = sphi 0, %s154
    %s169 = sphi 0, %s155
    %s175 = sphi 0, %s177
    %s178 = sphi 0, %s175
    %s179 = sphi 0, %s178
    %s195 = sphi 0, %s179
  $region4: #{_lambda_.6} parent=0 // loop_header_branch
    %16 = sbr.rel (%p14) target = $region8
  $region5: #{_lambda_.6} parent=0 // loop_body
    %s18 = ssub.s32 %s13, 1
    %s19 = ssub.s32 %s13, 2
    %s20 = sadd.s32 %s13, 1
    %s21 = ssub.s32 %s13, %s20
    %p22 = scmp.eq.s32.totalorder %s21, 0
    %s24 = sadd.s32 %s23, 1
    %s25 = scalar_select %p22, %s23, %s24
    %p28 = pneg %p22
    %p29 = scmp.eq.s32.totalorder %s13, 1
    %p30 = por %p28, %p29
    %p31 = scmp.ne.s32.totalorder %s23, %s26
    %p32 = scmp.eq.s32.totalorder %s13, 0
    %p33 = por %p31, %p32
    %p34 = scmp.ne.s32.totalorder %s23, %s26
    %p35 = scmp.eq.s32.totalorder %s18, 1
    %p36 = por %p34, %p35
    %p37 = scmp.ne.s32.totalorder %s26, %s27
    %p38 = scmp.eq.s32.totalorder %s18, 0
    %p39 = por %p37, %p38
    %p40 = scmp.ne.s32.totalorder %s26, %s27
    %p41 = scmp.eq.s32.totalorder %s19, 1
    %p42 = por %p40, %p41
    %p44 = scmp.ne.s32.totalorder %s27, %s43
    %p45 = scmp.eq.s32.totalorder %s19, 0
    %p46 = por %p44, %p45
    %s48 = sadd.s32 %s47, 1
    %p51 = scmp.eq.s32.totalorder %s13, 1
    %p52 = scmp.ne.s32.totalorder %s47, %s49
    %p53 = scmp.eq.s32.totalorder %s13, 0
    %p54 = por %p52, %p53
    %p55 = scmp.ne.s32.totalorder %s47, %s49
    %p56 = scmp.eq.s32.totalorder %s18, 1
    %p57 = por %p55, %p56
    %p58 = scmp.ne.s32.totalorder %s49, %s50
    %p59 = scmp.eq.s32.totalorder %s18, 0
    %p60 = por %p58, %p59
    %p61 = scmp.ne.s32.totalorder %s49, %s50
    %p62 = scmp.eq.s32.totalorder %s19, 1
    %p63 = por %p61, %p62
    %p65 = scmp.ne.s32.totalorder %s50, %s64
    %p66 = scmp.eq.s32.totalorder %s19, 0
    %p67 = por %p65, %p66
    %s69 = sadd.s32 %s68, 1
    %p72 = scmp.eq.s32.totalorder %s13, 1
    %p73 = scmp.ne.s32.totalorder %s68, %s70
    %p74 = scmp.eq.s32.totalorder %s13, 0
    %p75 = por %p73, %p74
    %p76 = scmp.ne.s32.totalorder %s68, %s70
    %p77 = scmp.eq.s32.totalorder %s18, 1
    %p78 = por %p76, %p77
    %p79 = scmp.ne.s32.totalorder %s70, %s71
    %p80 = scmp.eq.s32.totalorder %s18, 0
    %p81 = por %p79, %p80
    %p82 = scmp.ne.s32.totalorder %s70, %s71
    %p83 = scmp.eq.s32.totalorder %s19, 1
    %p84 = por %p82, %p83
    %p86 = scmp.ne.s32.totalorder %s71, %s85
    %p87 = scmp.eq.s32.totalorder %s19, 0
    %p88 = por %p86, %p87
    %s90 = sadd.s32 %s89, 1
    %p93 = scmp.eq.s32.totalorder %s13, 1
    %p94 = scmp.ne.s32.totalorder %s89, %s91
    %p95 = scmp.eq.s32.totalorder %s13, 0
    %p96 = por %p94, %p95
    %p97 = scmp.ne.s32.totalorder %s89, %s91
    %p98 = scmp.eq.s32.totalorder %s18, 1
    %p99 = por %p97, %p98
    %p100 = scmp.ne.s32.totalorder %s91, %s92
    %p101 = scmp.eq.s32.totalorder %s18, 0
    %p102 = por %p100, %p101
    %p103 = scmp.ne.s32.totalorder %s91, %s92
    %p104 = scmp.eq.s32.totalorder %s19, 1
    %p105 = por %p103, %p104
    %p107 = scmp.ne.s32.totalorder %s92, %s106
    %p108 = scmp.eq.s32.totalorder %s19, 0
    %p109 = por %p107, %p108
    %s111 = sadd.s32 %s110, 1
    %p114 = scmp.eq.s32.totalorder %s13, 1
    %p115 = scmp.ne.s32.totalorder %s110, %s112
    %p116 = scmp.eq.s32.totalorder %s13, 0
    %p117 = por %p115, %p116
    %p118 = scmp.ne.s32.totalorder %s110, %s112
    %p119 = scmp.eq.s32.totalorder %s18, 1
    %p120 = por %p118, %p119
    %p121 = scmp.ne.s32.totalorder %s112, %s113
    %p122 = scmp.eq.s32.totalorder %s18, 0
    %p123 = por %p121, %p122
    %p124 = scmp.ne.s32.totalorder %s112, %s113
    %p125 = scmp.eq.s32.totalorder %s19, 1
    %p126 = por %p124, %p125
    %p128 = scmp.ne.s32.totalorder %s113, %s127
    %p129 = scmp.eq.s32.totalorder %s19, 0
    %p130 = por %p128, %p129
    %s132 = sadd.s32 %s131, 1
    %p135 = scmp.eq.s32.totalorder %s13, 1
    %p136 = scmp.ne.s32.totalorder %s131, %s133
    %p137 = scmp.eq.s32.totalorder %s13, 0
    %p138 = por %p136, %p137
    %p139 = scmp.ne.s32.totalorder %s131, %s133
    %p140 = scmp.eq.s32.totalorder %s18, 1
    %p141 = por %p139, %p140
    %p142 = scmp.ne.s32.totalorder %s133, %s134
    %p143 = scmp.eq.s32.totalorder %s18, 0
    %p144 = por %p142, %p143
    %p145 = scmp.ne.s32.totalorder %s133, %s134
    %p146 = scmp.eq.s32.totalorder %s19, 1
    %p147 = por %p145, %p146
    %p149 = scmp.ne.s32.totalorder %s134, %s148
    %p150 = scmp.eq.s32.totalorder %s19, 0
    %p151 = por %p149, %p150
    %s153 = sadd.s32 %s152, 1
    %p156 = scmp.eq.s32.totalorder %s13, 1
    %p157 = scmp.ne.s32.totalorder %s152, %s154
    %p158 = scmp.eq.s32.totalorder %s13, 0
    %p159 = por %p157, %p158
    %p160 = scmp.ne.s32.totalorder %s152, %s154
    %p161 = scmp.eq.s32.totalorder %s18, 1
    %p162 = por %p160, %p161
    %p163 = scmp.ne.s32.totalorder %s154, %s155
    %p164 = scmp.eq.s32.totalorder %s18, 0
    %p165 = por %p163, %p164
    %p166 = scmp.ne.s32.totalorder %s154, %s155
    %p167 = scmp.eq.s32.totalorder %s19, 1
    %p168 = por %p166, %p167
    %p170 = scmp.ne.s32.totalorder %s155, %s169
    %p171 = scmp.eq.s32.totalorder %s19, 0
    %p172 = por %p170, %p171
    %s173 = ssub.s32 %s13, %s20
    %p174 = scmp.eq.s32.totalorder %s173, 0
    %s176 = sadd.s32 %s175, 1
    %s177 = scalar_select %p174, %s175, %s176
    %p180 = pneg %p174
    %p181 = scmp.eq.s32.totalorder %s13, 1
    %p182 = por %p180, %p181
    %p183 = scmp.ne.s32.totalorder %s175, %s178
    %p184 = scmp.eq.s32.totalorder %s13, 0
    %p185 = por %p183, %p184
    %p186 = scmp.ne.s32.totalorder %s175, %s178
    %p187 = scmp.eq.s32.totalorder %s18, 1
    %p188 = por %p186, %p187
    %p189 = scmp.ne.s32.totalorder %s178, %s179
    %p190 = scmp.eq.s32.totalorder %s18, 0
    %p191 = por %p189, %p190
    %p192 = scmp.ne.s32.totalorder %s178, %s179
    %p193 = scmp.eq.s32.totalorder %s19, 1
    %p194 = por %p192, %p193
    %p196 = scmp.ne.s32.totalorder %s179, %s195
    %p197 = scmp.eq.s32.totalorder %s19, 0
    %p198 = por %p196, %p197
    %p199 = scmp.le.s32.totalorder 1, %s13
    %p200 = scmp.lt.s32.totalorder %s13, 3
    %p201 = pnand %p199, %p200
    %p202 = pneg %p201
    // Predicated region
    $region9: #{_lambda_.6} parent=5 // pred_check
      _
    $region10: #{_lambda_.6} parent=5 // pred_check_branch
      %204 = sbr.rel (%p201) target = $region12
    $region11: #{_lambda_.6} parent=5 // pred_region
      %s205 = ssub.s32 %s13, 1
      // Predicated region
      $region13: #{_lambda_.6} parent=11 // pred_check
        %p206 = pneg %p60
      $region14: #{_lambda_.6} parent=11 // pred_check_branch
        %208 = sbr.rel (%p206) target = $region16
      $region15: #{_lambda_.6} parent=11 // pred_region
        _
      $region16: #{_lambda_.6} parent=11 // pred_fallthru
        _
      // Predicated region
      $region17: #{_lambda_.6} parent=11 // pred_check
        %p209 = pneg %p81
      $region18: #{_lambda_.6} parent=11 // pred_check_branch
        %211 = sbr.rel (%p209) target = $region20
      $region19: #{_lambda_.6} parent=11 // pred_region
        _
      $region20: #{_lambda_.6} parent=11 // pred_fallthru
        _
      // Predicated region
      $region21: #{_lambda_.6} parent=11 // pred_check
        %p212 = pneg %p102
      $region22: #{_lambda_.6} parent=11 // pred_check_branch
        %214 = sbr.rel (%p212) target = $region24
      $region23: #{_lambda_.6} parent=11 // pred_region
        _
      $region24: #{_lambda_.6} parent=11 // pred_fallthru
        _
      // Predicated region
      $region25: #{_lambda_.6} parent=11 // pred_check
        %p215 = pneg %p123
      $region26: #{_lambda_.6} parent=11 // pred_check_branch
        %217 = sbr.rel (%p215) target = $region28
      $region27: #{_lambda_.6} parent=11 // pred_region
        _
      $region28: #{_lambda_.6} parent=11 // pred_fallthru
        _
      // Predicated region
      $region29: #{_lambda_.6} parent=11 // pred_check
        %p218 = pneg %p144
      $region30: #{_lambda_.6} parent=11 // pred_check_branch
        %220 = sbr.rel (%p218) target = $region32
      $region31: #{_lambda_.6} parent=11 // pred_region
        _
      $region32: #{_lambda_.6} parent=11 // pred_fallthru
        _
      // Predicated region
      $region33: #{_lambda_.6} parent=11 // pred_check
        %p221 = pneg %p165
      $region34: #{_lambda_.6} parent=11 // pred_check_branch
        %223 = sbr.rel (%p221) target = $region36
      $region35: #{_lambda_.6} parent=11 // pred_region
        _
      $region36: #{_lambda_.6} parent=11 // pred_fallthru
        _
    $region12: #{_lambda_.6} parent=5 // pred_fallthru
      _
    %p224 = scmp.lt.s32.totalorder %s13, 2
    // Predicated region
    $region37: #{_lambda_.6} parent=5 // pred_check
      %p225 = pneg %p224
    $region38: #{_lambda_.6} parent=5 // pred_check_branch
      %227 = sbr.rel (%p225) target = $region40
    $region39: #{_lambda_.6} parent=5 // pred_region
      // Predicated region
      $region41: #{_lambda_.6} parent=39 // pred_check
        %p228 = pneg %p33
      $region42: #{_lambda_.6} parent=39 // pred_check_branch
        %230 = sbr.rel (%p228) target = $region44
      $region43: #{_lambda_.6} parent=39 // pred_region
        %p231 = scmp.lt.s32.totalorder %s13, 1
        %s232 = scalar_select %p231, %s13, 1
        %s233 = smul.addr %s232, 2
        %s234 = smul.addr %s233, 8
        %s235 = scalar_lea.vmem %s0, %s234
      $region44: #{_lambda_.6} parent=39 // pred_fallthru
        _
    $region40: #{_lambda_.6} parent=5 // pred_fallthru
      _
    %p236 = scmp.le.s32.totalorder 1, %s13
    %p237 = scmp.lt.s32.totalorder %s13, 3
    %p238 = pnand %p236, %p237
    %p239 = pneg %p238
    // Predicated region
    $region45: #{_lambda_.6} parent=5 // pred_check
      _
    $region46: #{_lambda_.6} parent=5 // pred_check_branch
      %241 = sbr.rel (%p238) target = $region48
    $region47: #{_lambda_.6} parent=5 // pred_region
      %s242 = ssub.s32 %s13, 1
      %p243 = scmp.lt.s32.totalorder %s18, 1
      %s244 = scalar_select %p243, %s18, 1
      %s245 = smul.addr %s244, 2
      %s246 = smul.addr %s245, 8
      %s247 = scalar_lea.vmem %s0, %s246
      %p248 = pneg %p39
      %p249 = pneg %p36
      %p250 = pneg %p60
      %p251 = pneg %p57
      %p252 = pneg %p81
      %p253 = pneg %p78
      %p254 = pneg %p102
      %p255 = pneg %p99
      %p256 = pneg %p123
      %p257 = pneg %p120
      %p258 = pneg %p144
      %p259 = pneg %p141
      %p260 = pneg %p165
      %p261 = pneg %p162
      %p262 = pneg %p191
      %p263 = pneg %p188
      %p264 = scmp.lt.s32.totalorder %s18, 1
      %s265 = scalar_select %p264, %s18, 1
      %s266 = smul.addr %s265, 2
      %s267 = smul.addr %s266, 8
      %s268 = scalar_lea.vmem %s7, %s267
      %p269 = scmp.lt.s32.totalorder %s18, 1
      %s270 = scalar_select %p269, %s18, 1
      %s271 = smul.addr %s270, 2
      %s272 = smul.addr %s271, 8
      %s273 = scalar_lea.vmem %s0, %s272
      %p274 = scmp.lt.s32.totalorder %s18, 1
      %s275 = scalar_select %p274, %s18, 1
      %s276 = smul.addr %s275, 2
      %s277 = smul.addr %s276, 8
      %s278 = scalar_lea.vmem %s7, %s277
      %v280 = vld [vmem:[%s273] sm:$0xff]
      %v281 = vld [vmem:[%s273 + $0x8] sm:$0xff]
      %v282 = vld [vmem:[%s1] sm:$0x1]
      %v283 = vld [vmem:[%s2] sm:$0x1]
      %vm284 = vcmask 523264
      %v285 = vsel %vm284, %v280, 0.0
      %286 = vadd.xlane.f32.xlu0 %v285
      %v287 = vpop.xlane.xlu0 %286
      %v288 = vsel %vm284, %v281, 0.0
      %289 = vadd.xlane.f32.xlu0 %v288
      %v290 = vpop.xlane.xlu0 %289
      %v291 = vrcp.pop 64.0
      %v292 = vmul.f32 %v287, %v291
      %v293 = vmul.f32 %v290, %v291
      %v294 = vsub.f32 %v280, %v292
      %v295 = vsub.f32 %v281, %v293
      %v296 = vmul.f32 %v294, %v294
      %v297 = vmul.f32 %v295, %v295
      %v298 = vsel %vm284, %v296, 0.0
      %299 = vadd.xlane.f32.xlu0 %v298
      %v300 = vpop.xlane.xlu0 %299
      %v301 = vsel %vm284, %v297, 0.0
      %302 = vadd.xlane.f32.xlu0 %v301
      %v303 = vpop.xlane.xlu0 %302
      %v304 = vmul.f32 %v300, %v291
      %v305 = vmul.f32 %v303, %v291
      %v306 = vadd.f32 %v304, 1e-05
      %v307 = vadd.f32 %v305, 1e-05
      %v308 = vrsqrt.pop %v306
      %v309 = vrsqrt.pop %v307
      %v310 = vmul.f32 %v294, %v308
      %v311 = vmul.f32 %v295, %v309
      %v313 = vlaneseq
      %v314 = vshrl.u32 %v313, 7
      %v315 = vsub.s32 0, %v314
      %v316 = vrot.slane %v282, %v315
      %v318 = vmul.f32 %v310, %v316
      %v319 = vmul.f32 %v311, %v316
      %v321 = vlaneseq
      %v322 = vshrl.u32 %v321, 7
      %v323 = vsub.s32 0, %v322
      %v324 = vrot.slane %v283, %v323
      %v326 = vadd.f32 %v318, %v324
      %v327 = vadd.f32 %v319, %v324
      %v328 = vpack.c.bf16 %v327, %v326
      %v329 = vld [vmem:[%s3] sm:$0xff]
      %v330 = vld [vmem:[%s3 + $0x8] sm:$0xff]
      %v331 = vld [vmem:[%s3 + $0x10] sm:$0xff]
      %v332 = vld [vmem:[%s3 + $0x18] sm:$0xff]
      %v333 = vld [vmem:[%s3 + $0x20] sm:$0xff]
      %v334 = vld [vmem:[%s3 + $0x28] sm:$0xff]
      %v335 = vld [vmem:[%s3 + $0x30] sm:$0xff]
      %v336 = vld [vmem:[%s3 + $0x38] sm:$0xff]
      %v337 = vld [vmem:[%s4] sm:$0x3]
      %v339 = vlaneseq
      %v340 = vshrl.u32 %v339, 7
      %v341 = vsub.s32 0, %v340
      %v342 = vrot.slane %v337, %v341
      %v343 = vlaneseq
      %v344 = vshrl.u32 %v343, 7
      %v345 = vsub.s32 1, %v344
      %v346 = vrot.slane %v337, %v345
      %v357 = vunpack.c.l.b16 %v329
      %v358 = vunpack.c.h.b16 %v329
      %v359 = vunpack.c.l.b16 %v330
      %v360 = vunpack.c.h.b16 %v330
      %v361 = vunpack.c.l.b16 %v331
      %v362 = vunpack.c.h.b16 %v331
      %v363 = vunpack.c.l.b16 %v332
      %v364 = vunpack.c.h.b16 %v332
      %v365 = vunpack.c.l.b16 %v333
      %v366 = vunpack.c.h.b16 %v333
      %v367 = vunpack.c.l.b16 %v334
      %v368 = vunpack.c.h.b16 %v334
      %v369 = vunpack.c.l.b16 %v335
      %v370 = vunpack.c.h.b16 %v335
      %v371 = vunpack.c.l.b16 %v336
      %v372 = vunpack.c.h.b16 %v336
      %v373 = vpack.c.b16 %v359, %v357
      %v374 = vpack.c.b16 %v360, %v358
      %v375 = vpack.c.b16 %v363, %v361
      %v376 = vpack.c.b16 %v364, %v362
      %v377 = vpack.c.b16 %v367, %v365
      %v378 = vpack.c.b16 %v368, %v366
      %v379 = vpack.c.b16 %v371, %v369
      %v380 = vpack.c.b16 %v372, %v370
      %v390 = vsel %vm284, %v328, 0
      %392 = vmatprep.subr.bf16.mxu0 0
      %393 = vmatpush1.bf16.msra.mxu0 0
      %394 = vmatprep.subr.bf16.mxu0 0
      %395 = vmatpush1.bf16.msra.mxu0 0
      %396 = vmatprep.subr.bf16.mxu0 0
      %397 = vmatpush1.bf16.msra.mxu0 0
      %398 = vmatprep.subr.bf16.mxu0 0
      %399 = vmatpush1.bf16.msra.mxu0 0
      %400 = vmatprep.subr.bf16.mxu0 %v380
      %401 = vmatpush1.bf16.msra.mxu0 %v379
      %402 = vmatprep.subr.bf16.mxu0 %v378
      %403 = vmatpush1.bf16.msra.mxu0 %v377
      %404 = vmatprep.subr.bf16.mxu0 %v376
      %405 = vmatpush1.bf16.msra.mxu0 %v375
      %406 = vmatprep.subr.bf16.mxu0 %v374
      %407 = vmatpush1.bf16.msra.mxu0 %v373
      %408 = vmatprep.subr.bf16.mxu0 0
      %409 = vmatpush2.bf16.msra.mxu0 0
      %410 = vmatprep.subr.bf16.mxu0 0
      %411 = vmatpush2.bf16.msra.mxu0 0
      %412 = vmatprep.subr.bf16.mxu0 0
      %413 = vmatpush2.bf16.msra.mxu0 0
      %414 = vmatprep.subr.bf16.mxu0 0
      %415 = vmatpush2.bf16.msra.mxu0 0
      %416 = vmatprep.subr.bf16.mxu0 0
      %417 = vmatpush2.bf16.msra.mxu0 0
      %418 = vmatprep.subr.bf16.mxu0 0
      %419 = vmatpush2.bf16.msra.mxu0 0
      %420 = vmatprep.subr.bf16.mxu0 0
      %421 = vmatpush2.bf16.msra.mxu0 0
      %422 = vmatprep.subr.bf16.mxu0 0
      %423 = vmatpush2.bf16.msra.mxu0 0
      %424 = vmatprep.mubr.bf16.mxu0 0
      %425 = vmatmul.mubr.bf16.gmra.mxu0 %v390
      %v426 = vpop.f32.mrf.mxu0
      %v427 = vadd.f32 %v342, %v426
      %v428 = vpop.f32.mrf.mxu0
      %v429 = vadd.f32 %v346, %v428
      %v430 = vpop.f32.mrf.mxu0
      %v431 = vadd.f32 %v342, %v430
      %v432 = vpop.f32.mrf.mxu0
      %v433 = vadd.f32 %v346, %v432
      %434 = vdwg.mxu0
      %v435 = vmul.f32 %v427, 0.5
      %v436 = vmul.f32 %v429, 0.5
      %v437 = vmul.f32 %v431, 0.5
      %v438 = vmul.f32 %v433, 0.5
      %v439 = vmul.f32 %v427, 0.044715
      %v440 = vmul.f32 %v429, 0.044715
      %v441 = vmul.f32 %v431, 0.044715
      %v442 = vmul.f32 %v433, 0.044715
      %v443 = vmul.f32 %v439, %v427
      %v444 = vmul.f32 %v440, %v429
      %v445 = vmul.f32 %v441, %v431
      %v446 = vmul.f32 %v442, %v433
      %v447 = vmul.f32 %v443, %v427
      %v448 = vmul.f32 %v444, %v429
      %v449 = vmul.f32 %v445, %v431
      %v450 = vmul.f32 %v446, %v433
      %v451 = vadd.f32 %v427, %v447
      %v452 = vadd.f32 %v429, %v448
      %v453 = vadd.f32 %v431, %v449
      %v454 = vadd.f32 %v433, %v450
      %v455 = vmul.f32 %v451, 0.7978846
      %v456 = vmul.f32 %v452, 0.7978846
      %v457 = vmul.f32 %v453, 0.7978846
      %v458 = vmul.f32 %v454, 0.7978846
      %v459 = vtanh.pop %v455
      %v460 = vtanh.pop %v456
      %v461 = vtanh.pop %v457
      %v462 = vtanh.pop %v458
      %v463 = vadd.f32 %v459, 1.0
      %v464 = vadd.f32 %v460, 1.0
      %v465 = vadd.f32 %v461, 1.0
      %v466 = vadd.f32 %v462, 1.0
      %v467 = vmul.f32 %v435, %v463
      %v468 = vmul.f32 %v436, %v464
      %v469 = vmul.f32 %v437, %v465
      %v470 = vmul.f32 %v438, %v466
      %v471 = vpack.c.bf16 %v469, %v467
      %v472 = vpack.c.bf16 %v470, %v468
      %v473 = vld [vmem:[%s5] sm:$0xf]
      %v474 = vld [vmem:[%s5 + $0x4] sm:$0xf]
      %v475 = vld [vmem:[%s5 + $0x8] sm:$0xf]
      %v476 = vld [vmem:[%s5 + $0xc] sm:$0xf]
      %v477 = vld [vmem:[%s5 + $0x10] sm:$0xf]
      %v478 = vld [vmem:[%s5 + $0x14] sm:$0xf]
      %v479 = vld [vmem:[%s5 + $0x18] sm:$0xf]
      %v480 = vld [vmem:[%s5 + $0x1c] sm:$0xf]
      %v481 = vld [vmem:[%s5 + $0x20] sm:$0xf]
      %v482 = vld [vmem:[%s5 + $0x24] sm:$0xf]
      %v483 = vld [vmem:[%s5 + $0x28] sm:$0xf]
      %v484 = vld [vmem:[%s5 + $0x2c] sm:$0xf]
      %v485 = vld [vmem:[%s5 + $0x30] sm:$0xf]
      %v486 = vld [vmem:[%s5 + $0x34] sm:$0xf]
      %v487 = vld [vmem:[%s5 + $0x38] sm:$0xf]
      %v488 = vld [vmem:[%s5 + $0x3c] sm:$0xf]
      %v489 = vld [vmem:[%s5 + $0x40] sm:$0xf]
      %v490 = vld [vmem:[%s5 + $0x44] sm:$0xf]
      %v491 = vld [vmem:[%s5 + $0x48] sm:$0xf]
      %v492 = vld [vmem:[%s5 + $0x4c] sm:$0xf]
      %v493 = vld [vmem:[%s5 + $0x50] sm:$0xf]
      %v494 = vld [vmem:[%s5 + $0x54] sm:$0xf]
      %v495 = vld [vmem:[%s5 + $0x58] sm:$0xf]
      %v496 = vld [vmem:[%s5 + $0x5c] sm:$0xf]
      %v497 = vld [vmem:[%s5 + $0x60] sm:$0xf]
      %v498 = vld [vmem:[%s5 + $0x64] sm:$0xf]
      %v499 = vld [vmem:[%s5 + $0x68] sm:$0xf]
      %v500 = vld [vmem:[%s5 + $0x6c] sm:$0xf]
      %v501 = vld [vmem:[%s5 + $0x70] sm:$0xf]
      %v502 = vld [vmem:[%s5 + $0x74] sm:$0xf]
      %v503 = vld [vmem:[%s5 + $0x78] sm:$0xf]
      %v504 = vld [vmem:[%s5 + $0x7c] sm:$0xf]
      %v505 = vld [vmem:[%s6] sm:$0x1]
      %v507 = vlaneseq
      %v508 = vshrl.u32 %v507, 7
      %v509 = vsub.s32 0, %v508
      %v510 = vrot.slane %v505, %v509
      %v544 = vunpack.c.l.b16 %v473
      %v545 = vunpack.c.l.b16 %v474
      %v546 = vunpack.c.l.b16 %v475
      %v547 = vunpack.c.l.b16 %v476
      %v548 = vunpack.c.l.b16 %v477
      %v549 = vunpack.c.l.b16 %v478
      %v550 = vunpack.c.l.b16 %v479
      %v551 = vunpack.c.l.b16 %v480
      %v552 = vunpack.c.l.b16 %v481
      %v553 = vunpack.c.l.b16 %v482
      %v554 = vunpack.c.l.b16 %v483
      %v555 = vunpack.c.l.b16 %v484
      %v556 = vunpack.c.l.b16 %v485
      %v557 = vunpack.c.l.b16 %v486
      %v558 = vunpack.c.l.b16 %v487
      %v559 = vunpack.c.l.b16 %v488
      %v560 = vunpack.c.l.b16 %v489
      %v561 = vunpack.c.l.b16 %v490
      %v562 = vunpack.c.l.b16 %v491
      %v563 = vunpack.c.l.b16 %v492
      %v564 = vunpack.c.l.b16 %v493
      %v565 = vunpack.c.l.b16 %v494
      %v566 = vunpack.c.l.b16 %v495
      %v567 = vunpack.c.l.b16 %v496
      %v568 = vunpack.c.l.b16 %v497
      %v569 = vunpack.c.l.b16 %v498
      %v570 = vunpack.c.l.b16 %v499
      %v571 = vunpack.c.l.b16 %v500
      %v572 = vunpack.c.l.b16 %v501
      %v573 = vunpack.c.l.b16 %v502
      %v574 = vunpack.c.l.b16 %v503
      %v575 = vunpack.c.l.b16 %v504
      %v576 = vpack.c.b16 %v545, %v544
      %v577 = vpack.c.b16 %v547, %v546
      %v578 = vpack.c.b16 %v549, %v548
      %v579 = vpack.c.b16 %v551, %v550
      %v580 = vpack.c.b16 %v553, %v552
      %v581 = vpack.c.b16 %v555, %v554
      %v582 = vpack.c.b16 %v557, %v556
      %v583 = vpack.c.b16 %v559, %v558
      %v584 = vpack.c.b16 %v561, %v560
      %v585 = vpack.c.b16 %v563, %v562
      %v586 = vpack.c.b16 %v565, %v564
      %v587 = vpack.c.b16 %v567, %v566
      %v588 = vpack.c.b16 %v569, %v568
      %v589 = vpack.c.b16 %v571, %v570
      %v590 = vpack.c.b16 %v573, %v572
      %v591 = vpack.c.b16 %v575, %v574
      %608 = vmatprep.subr.bf16.mxu0 0
      %609 = vmatpush1.bf16.msra.mxu0 %v583
      %610 = vmatprep.subr.bf16.mxu0 0
      %611 = vmatpush1.bf16.msra.mxu0 %v582
      %612 = vmatprep.subr.bf16.mxu0 0
      %613 = vmatpush1.bf16.msra.mxu0 %v581
      %614 = vmatprep.subr.bf16.mxu0 0
      %615 = vmatpush1.bf16.msra.mxu0 %v580
      %616 = vmatprep.subr.bf16.mxu0 0
      %617 = vmatpush1.bf16.msra.mxu0 %v579
      %618 = vmatprep.subr.bf16.mxu0 0
      %619 = vmatpush1.bf16.msra.mxu0 %v578
      %620 = vmatprep.subr.bf16.mxu0 0
      %621 = vmatpush1.bf16.msra.mxu0 %v577
      %622 = vmatprep.subr.bf16.mxu0 0
      %623 = vmatpush1.bf16.msra.mxu0 %v576
      %624 = vmatprep.subr.bf16.mxu0 0
      %625 = vmatpush2.bf16.msra.mxu0 %v591
      %626 = vmatprep.subr.bf16.mxu0 0
      %627 = vmatpush2.bf16.msra.mxu0 %v590
      %628 = vmatprep.subr.bf16.mxu0 0
      %629 = vmatpush2.bf16.msra.mxu0 %v589
      %630 = vmatprep.subr.bf16.mxu0 0
      %631 = vmatpush2.bf16.msra.mxu0 %v588
      %632 = vmatprep.subr.bf16.mxu0 0
      %633 = vmatpush2.bf16.msra.mxu0 %v587
      %634 = vmatprep.subr.bf16.mxu0 0
      %635 = vmatpush2.bf16.msra.mxu0 %v586
      %636 = vmatprep.subr.bf16.mxu0 0
      %637 = vmatpush2.bf16.msra.mxu0 %v585
      %638 = vmatprep.subr.bf16.mxu0 0
      %639 = vmatpush2.bf16.msra.mxu0 %v584
      %640 = vmatprep.mubr.bf16.mxu0 %v472
      %641 = vmatmul.mubr.bf16.gmra.mxu0 %v471
      %v642 = vpop.f32.mrf.mxu0
      %v643 = vadd.f32 %v510, %v642
      %v644 = vpop.f32.mrf.mxu0
      %v645 = vpop.f32.mrf.mxu0
      %v646 = vadd.f32 %v510, %v645
      %v647 = vpop.f32.mrf.mxu0
      %648 = vdwg.mxu0
      %v649 = vadd.f32 %v280, %v643
      %v650 = vadd.f32 %v281, %v646
      %651 = vst.msk [vmem:[%s278] sm:$0xff] %vm284, %v649
      %652 = vst.msk [vmem:[%s278 + $0x8] sm:$0xff] %vm284, %v650
      %p653 = scmp.lt.s32.totalorder %s18, 1
      %s654 = scalar_select %p653, %s18, 1
      %s655 = smul.addr %s654, 2
      %s656 = smul.addr %s655, 8
      %s657 = scalar_lea.vmem %s7, %s656
      // Predicated region
      $region49: #{_lambda_.6} parent=47 // pred_check
        %p658 = pneg %p188
      $region50: #{_lambda_.6} parent=47 // pred_check_branch
        %660 = sbr.rel (%p658) target = $region52
      $region51: #{_lambda_.6} parent=47 // pred_region
        _
      $region52: #{_lambda_.6} parent=47 // pred_fallthru
        _
    $region48: #{_lambda_.6} parent=5 // pred_fallthru
      _
    %p661 = scmp.le.s32.totalorder 2, %s13
    // Predicated region
    $region53: #{_lambda_.6} parent=5 // pred_check
      %p662 = pneg %p661
    $region54: #{_lambda_.6} parent=5 // pred_check_branch
      %664 = sbr.rel (%p662) target = $region56
    $region55: #{_lambda_.6} parent=5 // pred_region
      %s665 = ssub.s32 %s13, 2
      // Predicated region
      $region57: #{_lambda_.6} parent=55 // pred_check
        %p666 = pneg %p194
      $region58: #{_lambda_.6} parent=55 // pred_check_branch
        %668 = sbr.rel (%p666) target = $region60
      $region59: #{_lambda_.6} parent=55 // pred_region
        %p669 = scmp.lt.s32.totalorder %s19, 1
        %s670 = scalar_select %p669, %s19, 1
        %s671 = smul.addr %s670, 2
        %s672 = smul.addr %s671, 8
        %s673 = scalar_lea.vmem %s7, %s672
      $region60: #{_lambda_.6} parent=55 // pred_fallthru
        _
    $region56: #{_lambda_.6} parent=5 // pred_fallthru
      _
  $region6: #{_lambda_.6} parent=0 // loop_footer
    %s17 = sadd.s32 1, %s13
  $region7: #{_lambda_.6} parent=0 // loop_footer_branch
    %12 = sbr.rel target = $region3
  $region8: #{_lambda_.6} parent=0 // loop_exit
    _

// kernel: _lambda_.9
$region0: #{_lambda_.9}
  #allocation0 [shape = 'u32[]', space=smem, size = 0x4, offset = 0x4, fixed_abs, tag = 'smem constant byte address 0x4 - core index']
  #allocation1 [shape = 'u32[144,128]{1,0:T(1,128)}', space=vmem, size = 0x12000, scoped, tag = 'internal scratch']
  #allocation2 [shape = 'bf16[16,64]{1,0:T(8,128)(2,1)}', space=vmem, size = 0x1000, scoped, tag = 'scratch operand']
  %s0 = inlined_call_operand.vmem [shape: f32[2,16,64], index: 0, kind: input, shape index: {}]
  %s1 = inlined_call_operand.vmem [shape: f32[1,64], index: 1, kind: input, shape index: {}]
  %s2 = inlined_call_operand.vmem [shape: f32[1,64], index: 2, kind: input, shape index: {}]
  %s3 = inlined_call_operand.vmem [shape: bf16[512,64], index: 3, kind: input, shape index: {}]
  %s4 = inlined_call_operand.vmem [shape: f32[2,16,512], index: 4, kind: output, shape index: {}]
  %s5 = sld [smem:[#allocation0]]
  $region72: #{_lambda_.9} parent=0
    _
  %s7 = ssub.s32 1, %s5
  %s8 = scalar_select 0, %s7, %s5
  $region1: #{_lambda_.9} parent=0
    #allocation3 [shape = 'u8[32768]{0}', space=vmem, size = 0x8000, scoped, tag = 'output window, operand 0']
    loop: start=0, step=1, limit=6
    $region2: #{_lambda_.9} parent=1 // loop_pre_header
      _
    $region3: #{_lambda_.9} parent=1 // loop_header
      %s10 = sphi 0, %s14
      %p11 = scmp.ge.s32.totalorder %s10, 6
      %s17 = sphi 0, %s29
      %s18 = sphi 0, %s25
      %s19 = sphi 0, %s17
      %s20 = sphi 0, %s18
      %s21 = sphi 0, %s19
      %s22 = sphi 0, %s20
      %s32 = sphi 0, %s34
      %s35 = sphi 0, %s32
      %s36 = sphi 0, %s35
      %s52 = sphi 0, %s36
      %s56 = sphi 0, %s56
      %s58 = sphi 0, %s56
      %s59 = sphi 0, %s58
      %s73 = sphi 0, %s59
      %s77 = sphi 0, %s77
      %s79 = sphi 0, %s77
      %s80 = sphi 0, %s79
      %s94 = sphi 0, %s80
      %s100 = sphi 0, %s102
      %s103 = sphi 0, %s100
      %s104 = sphi 0, %s103
      %s120 = sphi 0, %s104
      %s128 = sphi 0, %s130
      %s131 = sphi 0, %s128
      %s132 = sphi 0, %s131
      %s148 = sphi 0, %s132
    $region4: #{_lambda_.9} parent=1 // loop_header_branch
      %13 = sbr.rel (%p11) target = $region8
    $region5: #{_lambda_.9} parent=1 // loop_body
      %s15 = ssub.s32 %s10, 1
      %s16 = ssub.s32 %s10, 2
      %s23 = sadd.s32 1, %s18
      %p24 = scmp.ge.s32.totalorder %s23, 2
      %s25 = scalar_select %p24, 0, %s23
      %s26 = sadd.s32 1, %s17
      %s27 = scalar_select %p24, %s26, %s17
      %p28 = scmp.ge.s32.totalorder %s27, 2
      %s29 = scalar_select %p28, 0, %s27
      %s30 = ssub.s32 %s17, %s29
      %p31 = scmp.eq.s32.totalorder %s30, 0
      %s33 = sadd.s32 %s32, 1
      %s34 = scalar_select %p31, %s32, %s33
      %p37 = pneg %p31
      %p38 = scmp.eq.s32.totalorder %s10, 3
      %p39 = por %p37, %p38
      %p40 = scmp.ne.s32.totalorder %s32, %s35
      %p41 = scmp.eq.s32.totalorder %s10, 0
      %p42 = por %p40, %p41
      %p43 = scmp.ne.s32.totalorder %s32, %s35
      %p44 = scmp.eq.s32.totalorder %s15, 3
      %p45 = por %p43, %p44
      %p46 = scmp.ne.s32.totalorder %s35, %s36
      %p47 = scmp.eq.s32.totalorder %s15, 0
      %p48 = por %p46, %p47
      %p49 = scmp.ne.s32.totalorder %s35, %s36
      %p50 = scmp.eq.s32.totalorder %s16, 3
      %p51 = por %p49, %p50
      %p53 = scmp.ne.s32.totalorder %s36, %s52
      %p54 = scmp.eq.s32.totalorder %s16, 0
      %p55 = por %p53, %p54
      %s57 = sadd.s32 %s56, 1
      %p60 = scmp.eq.s32.totalorder %s10, 3
      %p61 = scmp.ne.s32.totalorder %s56, %s58
      %p62 = scmp.eq.s32.totalorder %s10, 0
      %p63 = por %p61, %p62
      %p64 = scmp.ne.s32.totalorder %s56, %s58
      %p65 = scmp.eq.s32.totalorder %s15, 3
      %p66 = por %p64, %p65
      %p67 = scmp.ne.s32.totalorder %s58, %s59
      %p68 = scmp.eq.s32.totalorder %s15, 0
      %p69 = por %p67, %p68
      %p70 = scmp.ne.s32.totalorder %s58, %s59
      %p71 = scmp.eq.s32.totalorder %s16, 3
      %p72 = por %p70, %p71
      %p74 = scmp.ne.s32.totalorder %s59, %s73
      %p75 = scmp.eq.s32.totalorder %s16, 0
      %p76 = por %p74, %p75
      %s78 = sadd.s32 %s77, 1
      %p81 = scmp.eq.s32.totalorder %s10, 3
      %p82 = scmp.ne.s32.totalorder %s77, %s79
      %p83 = scmp.eq.s32.totalorder %s10, 0
      %p84 = por %p82, %p83
      %p85 = scmp.ne.s32.totalorder %s77, %s79
      %p86 = scmp.eq.s32.totalorder %s15, 3
      %p87 = por %p85, %p86
      %p88 = scmp.ne.s32.totalorder %s79, %s80
      %p89 = scmp.eq.s32.totalorder %s15, 0
      %p90 = por %p88, %p89
      %p91 = scmp.ne.s32.totalorder %s79, %s80
      %p92 = scmp.eq.s32.totalorder %s16, 3
      %p93 = por %p91, %p92
      %p95 = scmp.ne.s32.totalorder %s80, %s94
      %p96 = scmp.eq.s32.totalorder %s16, 0
      %p97 = por %p95, %p96
      %s98 = ssub.s32 %s18, %s25
      %p99 = scmp.eq.s32.totalorder %s98, 0
      %s101 = sadd.s32 %s100, 1
      %s102 = scalar_select %p99, %s100, %s101
      %p105 = pneg %p99
      %p106 = scmp.eq.s32.totalorder %s10, 3
      %p107 = por %p105, %p106
      %p108 = scmp.ne.s32.totalorder %s100, %s103
      %p109 = scmp.eq.s32.totalorder %s10, 0
      %p110 = por %p108, %p109
      %p111 = scmp.ne.s32.totalorder %s100, %s103
      %p112 = scmp.eq.s32.totalorder %s15, 3
      %p113 = por %p111, %p112
      %p114 = scmp.ne.s32.totalorder %s103, %s104
      %p115 = scmp.eq.s32.totalorder %s15, 0
      %p116 = por %p114, %p115
      %p117 = scmp.ne.s32.totalorder %s103, %s104
      %p118 = scmp.eq.s32.totalorder %s16, 3
      %p119 = por %p117, %p118
      %p121 = scmp.ne.s32.totalorder %s104, %s120
      %p122 = scmp.eq.s32.totalorder %s16, 0
      %p123 = por %p121, %p122
      %s124 = ssub.s32 %s17, %s29
      %s125 = ssub.s32 %s18, %s25
      %s126 = sor.u32 %s124, %s125
      %p127 = scmp.eq.s32.totalorder %s126, 0
      %s129 = sadd.s32 %s128, 1
      %s130 = scalar_select %p127, %s128, %s129
      %p133 = pneg %p127
      %p134 = scmp.eq.s32.totalorder %s10, 3
      %p135 = por %p133, %p134
      %p136 = scmp.ne.s32.totalorder %s128, %s131
      %p137 = scmp.eq.s32.totalorder %s10, 0
      %p138 = por %p136, %p137
      %p139 = scmp.ne.s32.totalorder %s128, %s131
      %p140 = scmp.eq.s32.totalorder %s15, 3
      %p141 = por %p139, %p140
      %p142 = scmp.ne.s32.totalorder %s131, %s132
      %p143 = scmp.eq.s32.totalorder %s15, 0
      %p144 = por %p142, %p143
      %p145 = scmp.ne.s32.totalorder %s131, %s132
      %p146 = scmp.eq.s32.totalorder %s16, 3
      %p147 = por %p145, %p146
      %p149 = scmp.ne.s32.totalorder %s132, %s148
      %p150 = scmp.eq.s32.totalorder %s16, 0
      %p151 = por %p149, %p150
      %p152 = scmp.le.s32.totalorder 1, %s10
      %p153 = scmp.lt.s32.totalorder %s10, 5
      %p154 = pnand %p152, %p153
      %p155 = pneg %p154
      // Predicated region
      $region9: #{_lambda_.9} parent=5 // pred_check
        _
      $region10: #{_lambda_.9} parent=5 // pred_check_branch
        %157 = sbr.rel (%p154) target = $region12
      $region11: #{_lambda_.9} parent=5 // pred_region
        %s158 = ssub.s32 %s10, 1
        // Predicated region
        $region13: #{_lambda_.9} parent=11 // pred_check
          %p159 = pneg %p69
        $region14: #{_lambda_.9} parent=11 // pred_check_branch
          %161 = sbr.rel (%p159) target = $region16
        $region15: #{_lambda_.9} parent=11 // pred_region
          _
        $region16: #{_lambda_.9} parent=11 // pred_fallthru
          _
        // Predicated region
        $region17: #{_lambda_.9} parent=11 // pred_check
          %p162 = pneg %p90
        $region18: #{_lambda_.9} parent=11 // pred_check_branch
          %164 = sbr.rel (%p162) target = $region20
        $region19: #{_lambda_.9} parent=11 // pred_region
          _
        $region20: #{_lambda_.9} parent=11 // pred_fallthru
          _
      $region12: #{_lambda_.9} parent=5 // pred_fallthru
        _
      %p165 = scmp.lt.s32.totalorder %s10, 4
      // Predicated region
      $region21: #{_lambda_.9} parent=5 // pred_check
        %p166 = pneg %p165
      $region22: #{_lambda_.9} parent=5 // pred_check_branch
        %168 = sbr.rel (%p166) target = $region24
      $region23: #{_lambda_.9} parent=5 // pred_region
        // Predicated region
        $region25: #{_lambda_.9} parent=23 // pred_check
          %p169 = pneg %p42
        $region26: #{_lambda_.9} parent=23 // pred_check_branch
          %171 = sbr.rel (%p169) target = $region28
        $region27: #{_lambda_.9} parent=23 // pred_region
          %p172 = scmp.lt.s32.totalorder %s17, 1
          %s173 = scalar_select %p172, %s17, 1
          %s174 = smul.addr %s173, 2
          %s175 = smul.addr %s174, 8
          %s176 = scalar_lea.vmem %s0, %s175
        $region28: #{_lambda_.9} parent=23 // pred_fallthru
          _
        // Predicated region
        $region29: #{_lambda_.9} parent=23 // pred_check
          %p177 = pneg %p110
        $region30: #{_lambda_.9} parent=23 // pred_check_branch
          %179 = sbr.rel (%p177) target = $region32
        $region31: #{_lambda_.9} parent=23 // pred_region
          %s180 = smul.u32 32, %s18
          %p181 = scmp.lt.s32.totalorder %s180, 63
          %s182 = scalar_select %p181, %s180, 63
          %s183 = smul.addr %s182, 4
          %s184 = scalar_lea.vmem %s3, %s183
          %s185 = smul.u32 32, %s18
        $region32: #{_lambda_.9} parent=23 // pred_fallthru
          _
      $region24: #{_lambda_.9} parent=5 // pred_fallthru
        _
      %p186 = scmp.le.s32.totalorder 1, %s10
      %p187 = scmp.lt.s32.totalorder %s10, 5
      %p188 = pnand %p186, %p187
      %p189 = pneg %p188
      // Predicated region
      $region33: #{_lambda_.9} parent=5 // pred_check
        _
      $region34: #{_lambda_.9} parent=5 // pred_check_branch
        %191 = sbr.rel (%p188) target = $region36
      $region35: #{_lambda_.9} parent=5 // pred_region
        %s192 = ssub.s32 %s10, 1
        %p193 = scmp.lt.s32.totalorder %s19, 1
        %s194 = scalar_select %p193, %s19, 1
        %s195 = smul.addr %s194, 2
        %s196 = smul.addr %s195, 8
        %s197 = scalar_lea.vmem %s0, %s196
        %p198 = pneg %p48
        %p199 = pneg %p45
        %p200 = pneg %p69
        %p201 = pneg %p66
        %p202 = pneg %p90
        %p203 = pneg %p87
        %s204 = smul.u32 32, %s20
        %p205 = scmp.lt.s32.totalorder %s204, 63
        %s206 = scalar_select %p205, %s204, 63
        %s207 = smul.addr %s206, 4
        %s208 = scalar_lea.vmem %s3, %s207
        %p209 = pneg %p116
        %p210 = pneg %p113
        %p211 = pneg %p144
        %p212 = pneg %p141
        %s213 = sand.u32 %s131, 1
        %s214 = sand.u32 %s131, 1
        %s215 = smul.addr %s214, 32
        %s216 = scalar_lea.vmem [#allocation3], %s215
        %p217 = scmp.lt.s32.totalorder %s19, 1
        %s218 = scalar_select %p217, %s19, 1
        %s219 = smul.addr %s218, 2
        %s220 = smul.addr %s219, 8
        %s221 = scalar_lea.vmem %s0, %s220
        %s222 = smul.u32 32, %s20
        %p223 = scmp.lt.s32.totalorder %s222, 63
        %s224 = scalar_select %p223, %s222, 63
        %s225 = smul.addr %s224, 4
        %s226 = scalar_lea.vmem %s3, %s225
        %s227 = smul.u32 32, %s20
        %s228 = smul.u32 2, %s20
        %p230 = scmp.eq.s32.totalorder %s20, 0
        // Predicated region
        $region37: #{_lambda_.9} parent=35 // pred_check
          %p231 = pneg %p230
        $region38: #{_lambda_.9} parent=35 // pred_check_branch
          %233 = sbr.rel (%p231) target = $region40
        $region39: #{_lambda_.9} parent=35 // pred_region
          %v234 = vld [vmem:[%s221] sm:$0xff]
          %v235 = vld [vmem:[%s221 + $0x8] sm:$0xff]
          %v236 = vld [vmem:[%s1] sm:$0x1]
          %v237 = vld [vmem:[%s2] sm:$0x1]
          %vm238 = vcmask 523264
          %v239 = vsel %vm238, %v234, 0.0
          %240 = vadd.xlane.f32.xlu0 %v239
          %v241 = vpop.xlane.xlu0 %240
          %v242 = vsel %vm238, %v235, 0.0
          %243 = vadd.xlane.f32.xlu0 %v242
          %v244 = vpop.xlane.xlu0 %243
          %v245 = vrcp.pop 64.0
          %v246 = vmul.f32 %v241, %v245
          %v247 = vmul.f32 %v244, %v245
          %v248 = vsub.f32 %v234, %v246
          %v249 = vsub.f32 %v235, %v247
          %v250 = vmul.f32 %v248, %v248
          %v251 = vmul.f32 %v249, %v249
          %v252 = vsel %vm238, %v250, 0.0
          %253 = vadd.xlane.f32.xlu0 %v252
          %v254 = vpop.xlane.xlu0 %253
          %v255 = vsel %vm238, %v251, 0.0
          %256 = vadd.xlane.f32.xlu0 %v255
          %v257 = vpop.xlane.xlu0 %256
          %v258 = vmul.f32 %v254, %v245
          %v259 = vmul.f32 %v257, %v245
          %v260 = vadd.f32 %v258, 1e-05
          %v261 = vadd.f32 %v259, 1e-05
          %v262 = vrsqrt.pop %v260
          %v263 = vrsqrt.pop %v261
          %v264 = vmul.f32 %v248, %v262
          %v265 = vmul.f32 %v249, %v263
          %v267 = vlaneseq
          %v268 = vshrl.u32 %v267, 7
          %v269 = vsub.s32 0, %v268
          %v270 = vrot.slane %v236, %v269
          %v272 = vmul.f32 %v264, %v270
          %v273 = vmul.f32 %v265, %v270
          %v275 = vlaneseq
          %v276 = vshrl.u32 %v275, 7
          %v277 = vsub.s32 0, %v276
          %v278 = vrot.slane %v237, %v277
          %v280 = vadd.f32 %v272, %v278
          %v281 = vadd.f32 %v273, %v278
          %v282 = vpack.c.bf16 %v281, %v280
          %v284 = vunpack.c.l.b16 %v282
          %v285 = vunpack.c.h.b16 %v282
          %v286 = vpack.c.b16 %v284, %v284
          %v287 = vpack.c.b16 %v285, %v285
          %vm290 = vcmask 519168
          %291 = vst.msk [vmem:[#allocation2] sm:$0xf] %vm290, %v286
          %292 = vst.msk [vmem:[#allocation2 + $0x4] sm:$0xf] %vm290, %v287
        $region40: #{_lambda_.9} parent=35 // pred_fallthru
          _
        %v293 = vld [vmem:[#allocation2] sm:$0xf]
        %v294 = vld [vmem:[#allocation2 + $0x4] sm:$0xf]
        %v295 = vld [vmem:[%s226] sm:$0xf]
        %v296 = vld [vmem:[%s226 + $0x4] sm:$0xf]
        %v297 = vld [vmem:[%s226 + $0x8] sm:$0xf]
        %v298 = vld [vmem:[%s226 + $0xc] sm:$0xf]
        %v299 = vld [vmem:[%s226 + $0x10] sm:$0xf]
        %v300 = vld [vmem:[%s226 + $0x14] sm:$0xf]
        %v301 = vld [vmem:[%s226 + $0x18] sm:$0xf]
        %v302 = vld [vmem:[%s226 + $0x1c] sm:$0xf]
        %v303 = vld [vmem:[%s226 + $0x20] sm:$0xf]
        %v304 = vld [vmem:[%s226 + $0x24] sm:$0xf]
        %v305 = vld [vmem:[%s226 + $0x28] sm:$0xf]
        %v306 = vld [vmem:[%s226 + $0x2c] sm:$0xf]
        %v307 = vld [vmem:[%s226 + $0x30] sm:$0xf]
        %v308 = vld [vmem:[%s226 + $0x34] sm:$0xf]
        %v309 = vld [vmem:[%s226 + $0x38] sm:$0xf]
        %v310 = vld [vmem:[%s226 + $0x3c] sm:$0xf]
        %v311 = vld [vmem:[%s226 + $0x40] sm:$0xf]
        %v312 = vld [vmem:[%s226 + $0x44] sm:$0xf]
        %v313 = vld [vmem:[%s226 + $0x48] sm:$0xf]
        %v314 = vld [vmem:[%s226 + $0x4c] sm:$0xf]
        %v315 = vld [vmem:[%s226 + $0x50] sm:$0xf]
        %v316 = vld [vmem:[%s226 + $0x54] sm:$0xf]
        %v317 = vld [vmem:[%s226 + $0x58] sm:$0xf]
        %v318 = vld [vmem:[%s226 + $0x5c] sm:$0xf]
        %v319 = vld [vmem:[%s226 + $0x60] sm:$0xf]
        %v320 = vld [vmem:[%s226 + $0x64] sm:$0xf]
        %v321 = vld [vmem:[%s226 + $0x68] sm:$0xf]
        %v322 = vld [vmem:[%s226 + $0x6c] sm:$0xf]
        %v323 = vld [vmem:[%s226 + $0x70] sm:$0xf]
        %v324 = vld [vmem:[%s226 + $0x74] sm:$0xf]
        %v325 = vld [vmem:[%s226 + $0x78] sm:$0xf]
        %v326 = vld [vmem:[%s226 + $0x7c] sm:$0xf]
        %v329 = vunpack.c.l.b16 %v293
        %v330 = vunpack.c.l.b16 %v294
        %v331 = vpack.c.b16 %v330, %v329
        %v364 = vunpack.c.l.b16 %v295
        %v365 = vunpack.c.l.b16 %v296
        %v366 = vunpack.c.l.b16 %v297
        %v367 = vunpack.c.l.b16 %v298
        %v368 = vunpack.c.l.b16 %v299
        %v369 = vunpack.c.l.b16 %v300
        %v370 = vunpack.c.l.b16 %v301
        %v371 = vunpack.c.l.b16 %v302
        %v372 = vunpack.c.l.b16 %v303
        %v373 = vunpack.c.l.b16 %v304
        %v374 = vunpack.c.l.b16 %v305
        %v375 = vunpack.c.l.b16 %v306
        %v376 = vunpack.c.l.b16 %v307
        %v377 = vunpack.c.l.b16 %v308
        %v378 = vunpack.c.l.b16 %v309
        %v379 = vunpack.c.l.b16 %v310
        %v380 = vunpack.c.l.b16 %v311
        %v381 = vunpack.c.l.b16 %v312
        %v382 = vunpack.c.l.b16 %v313
        %v383 = vunpack.c.l.b16 %v314
        %v384 = vunpack.c.l.b16 %v315
        %v385 = vunpack.c.l.b16 %v316
        %v386 = vunpack.c.l.b16 %v317
        %v387 = vunpack.c.l.b16 %v318
        %v388 = vunpack.c.l.b16 %v319
        %v389 = vunpack.c.l.b16 %v320
        %v390 = vunpack.c.l.b16 %v321
        %v391 = vunpack.c.l.b16 %v322
        %v392 = vunpack.c.l.b16 %v323
        %v393 = vunpack.c.l.b16 %v324
        %v394 = vunpack.c.l.b16 %v325
        %v395 = vunpack.c.l.b16 %v326
        %v396 = vpack.c.b16 %v365, %v364
        %v397 = vpack.c.b16 %v367, %v366
        %v398 = vpack.c.b16 %v369, %v368
        %v399 = vpack.c.b16 %v371, %v370
        %v400 = vpack.c.b16 %v373, %v372
        %v401 = vpack.c.b16 %v375, %v374
        %v402 = vpack.c.b16 %v377, %v376
        %v403 = vpack.c.b16 %v379, %v378
        %v404 = vpack.c.b16 %v381, %v380
        %v405 = vpack.c.b16 %v383, %v382
        %v406 = vpack.c.b16 %v385, %v384
        %v407 = vpack.c.b16 %v387, %v386
        %v408 = vpack.c.b16 %v389, %v388
        %v409 = vpack.c.b16 %v391, %v390
        %v410 = vpack.c.b16 %v393, %v392
        %v411 = vpack.c.b16 %v395, %v394
        %vm412 = vcmask 523264
        %v414 = vsel %vm412, %v331, 0
        %v417 = vsel %vm412, %v396, 0
        %v420 = vsel %vm412, %v397, 0
        %v423 = vsel %vm412, %v398, 0
        %v426 = vsel %vm412, %v399, 0
        %v429 = vsel %vm412, %v400, 0
        %v432 = vsel %vm412, %v401, 0
        %v435 = vsel %vm412, %v402, 0
        %v438 = vsel %vm412, %v403, 0
        %v441 = vsel %vm412, %v404, 0
        %v444 = vsel %vm412, %v405, 0
        %v447 = vsel %vm412, %v406, 0
        %v450 = vsel %vm412, %v407, 0
        %v453 = vsel %vm412, %v408, 0
        %v456 = vsel %vm412, %v409, 0
        %v459 = vsel %vm412, %v410, 0
        %v462 = vsel %vm412, %v411, 0
        %464 = vmatprep.subr.bf16.mxu0 0
        %465 = vmatpush1.bf16.xpose.msra.mxu0 %v438
        %466 = vmatprep.subr.bf16.mxu0 0
        %467 = vmatpush1.bf16.xpose.msra.mxu0 %v435
        %468 = vmatprep.subr.bf16.mxu0 0
        %469 = vmatpush1.bf16.xpose.msra.mxu0 %v432
        %470 = vmatprep.subr.bf16.mxu0 0
        %471 = vmatpush1.bf16.xpose.msra.mxu0 %v429
        %472 = vmatprep.subr.bf16.mxu0 0
        %473 = vmatpush1.bf16.xpose.msra.mxu0 %v426
        %474 = vmatprep.subr.bf16.mxu0 0
        %475 = vmatpush1.bf16.xpose.msra.mxu0 %v423
        %476 = vmatprep.subr.bf16.mxu0 0
        %477 = vmatpush1.bf16.xpose.msra.mxu0 %v420
        %478 = vmatprep.subr.bf16.mxu0 0
        %479 = vmatpush1.bf16.xpose.msra.mxu0 %v417
        %480 = vmatprep.subr.bf16.mxu0 0
        %481 = vmatpush2.bf16.xpose.msra.mxu0 %v462
        %482 = vmatprep.subr.bf16.mxu0 0
        %483 = vmatpush2.bf16.xpose.msra.mxu0 %v459
        %484 = vmatprep.subr.bf16.mxu0 0
        %485 = vmatpush2.bf16.xpose.msra.mxu0 %v456
        %486 = vmatprep.subr.bf16.mxu0 0
        %487 = vmatpush2.bf16.xpose.msra.mxu0 %v453
        %488 = vmatprep.subr.bf16.mxu0 0
        %489 = vmatpush2.bf16.xpose.msra.mxu0 %v450
        %490 = vmatprep.subr.bf16.mxu0 0
        %491 = vmatpush2.bf16.xpose.msra.mxu0 %v447
        %492 = vmatprep.subr.bf16.mxu0 0
        %493 = vmatpush2.bf16.xpose.msra.mxu0 %v444
        %494 = vmatprep.subr.bf16.mxu0 0
        %495 = vmatpush2.bf16.xpose.msra.mxu0 %v441
        %496 = vmatprep.mubr.bf16.mxu0 0
        %497 = vmatmul.mubr.bf16.gmra.mxu0 %v414
        %v498 = vpop.f32.mrf.mxu0
        %v499 = vadd.f32 0.0, %v498
        %v500 = vpop.f32.mrf.mxu0
        %v501 = vadd.f32 0.0, %v500
        %v502 = vpop.f32.mrf.mxu0
        %v503 = vadd.f32 0.0, %v502
        %v504 = vpop.f32.mrf.mxu0
        %v505 = vadd.f32 0.0, %v504
        %506 = vdwg.mxu0
        %507 = vst [vmem:[%s216] sm:$0xff] %v499
        %508 = vst [vmem:[%s216 + $0x8] sm:$0xff] %v501
        %509 = vst [vmem:[%s216 + $0x10] sm:$0xff] %v503
        %510 = vst [vmem:[%s216 + $0x18] sm:$0xff] %v505
        %s511 = sand.u32 %s131, 1
        %s512 = sand.u32 %s131, 1
        %s513 = smul.addr %s512, 32
        %s514 = scalar_lea.vmem [#allocation3], %s513
        // Predicated region
        $region41: #{_lambda_.9} parent=35 // pred_check
          %p515 = pneg %p141
        $region42: #{_lambda_.9} parent=35 // pred_check_branch
          %517 = sbr.rel (%p515) target = $region44
        $region43: #{_lambda_.9} parent=35 // pred_region
          %s518 = smul.u32 2, %s20
          %s519 = smul.addr %s19, 8
          %s520 = sadd.s32 %s518, %s519
          %s521 = smul.addr %s520, 8
          %s522 = scalar_lea.vmem %s4, %s521
          // Predicated region
          $region45: #{_lambda_.9} parent=43 // pred_check
            _
          $region46: #{_lambda_.9} parent=43 // pred_check_branch
            %524 = sbr.rel (0) target = $region48
          $region47: #{_lambda_.9} parent=43 // pred_region
            // Predicated region
            $region49: #{_lambda_.9} parent=47 // pred_check
              _
            $region50: #{_lambda_.9} parent=47 // pred_check_branch
              %526 = sbr.rel (0) target = $region52
            $region51: #{_lambda_.9} parent=47 // pred_region
              loop: start=0, step=1, limit=1
              $region53: #{_lambda_.9} parent=51 // loop_pre_header
                _
              $region54: #{_lambda_.9} parent=51 // loop_header
                %s528 = sphi 0, %s532
                %p529 = scmp.ge.s32.totalorder %s528, 1
                %s533 = sphi %s514, %s514
                %s534 = sphi %s522, %s522
              $region55: #{_lambda_.9} parent=51 // loop_header_branch
                %531 = sbr.rel (%p529) target = $region59
              $region56: #{_lambda_.9} parent=51 // loop_body
                %v535 = vld [vmem:[%s533] sm:$0xff]
                %536 = vst [vmem:[%s534] sm:$0xff] %v535
                %v537 = vld [vmem:[%s533 + $0x8] sm:$0xff]
                %538 = vst [vmem:[%s534 + $0x8] sm:$0xff] %v537
                %v539 = vld [vmem:[%s533 + $0x10] sm:$0xff]
                %540 = vst [vmem:[%s534 + $0x20] sm:$0xff] %v539
                %v541 = vld [vmem:[%s533 + $0x18] sm:$0xff]
                %542 = vst [vmem:[%s534 + $0x28] sm:$0xff] %v541
              $region57: #{_lambda_.9} parent=51 // loop_footer
                %s532 = sadd.s32 1, %s528
              $region58: #{_lambda_.9} parent=51 // loop_footer_branch
                %527 = sbr.rel target = $region54
              $region59: #{_lambda_.9} parent=51 // loop_exit
                _
            $region52: #{_lambda_.9} parent=47 // pred_fallthru
              _
            // Predicated region
            $region60: #{_lambda_.9} parent=47 // pred_check
              _
            $region61: #{_lambda_.9} parent=47 // pred_check_branch
              %544 = sbr.rel target = $region63
            $region62: #{_lambda_.9} parent=47 // pred_region
              _
            $region63: #{_lambda_.9} parent=47 // pred_fallthru
              _
          $region48: #{_lambda_.9} parent=43 // pred_fallthru
            _
          %545 = vnop
        $region44: #{_lambda_.9} parent=35 // pred_fallthru
          _
      $region36: #{_lambda_.9} parent=5 // pred_fallthru
        _
      %p546 = scmp.le.s32.totalorder 2, %s10
      // Predicated region
      $region64: #{_lambda_.9} parent=5 // pred_check
        %p547 = pneg %p546
      $region65: #{_lambda_.9} parent=5 // pred_check_branch
        %549 = sbr.rel (%p547) target = $region67
      $region66: #{_lambda_.9} parent=5 // pred_region
        %s550 = ssub.s32 %s10, 2
        // Predicated region
        $region68: #{_lambda_.9} parent=66 // pred_check
          %p551 = pneg %p147
        $region69: #{_lambda_.9} parent=66 // pred_check_branch
          %553 = sbr.rel (%p551) target = $region71
        $region70: #{_lambda_.9} parent=66 // pred_region
          %s554 = sand.u32 %s132, 1
          %s555 = sand.u32 %s132, 1
          %s556 = smul.addr %s555, 32
          %s557 = scalar_lea.vmem [#allocation3], %s556
        $region71: #{_lambda_.9} parent=66 // pred_fallthru
          _
      $region67: #{_lambda_.9} parent=5 // pred_fallthru
        _
    $region6: #{_lambda_.9} parent=1 // loop_footer
      %s14 = sadd.s32 1, %s10
    $region7: #{_lambda_.9} parent=1 // loop_footer_branch
      %9 = sbr.rel target = $region3
    $region8: #{_lambda_.9} parent=1 // loop_exit
      _

// kernel: _lambda_.5
$region0: #{_lambda_.5}
  #allocation0 [shape = 'u32[]', space=smem, size = 0x4, offset = 0x4, fixed_abs, tag = 'smem constant byte address 0x4 - core index']
  #allocation1 [shape = 'u32[144,128]{1,0:T(1,128)}', space=vmem, size = 0x12000, scoped, tag = 'internal scratch']
  %s0 = inlined_call_operand.vmem [shape: f32[2,16,64], index: 0, kind: input, shape index: {}]
  %s1 = inlined_call_operand.vmem [shape: f32[1,64], index: 1, kind: input, shape index: {}]
  %s2 = inlined_call_operand.vmem [shape: f32[1,64], index: 2, kind: input, shape index: {}]
  %s3 = inlined_call_operand.vmem [shape: bf16[64,192], index: 3, kind: input, shape index: {}]
  %s4 = inlined_call_operand.vmem [shape: f32[1,192], index: 4, kind: input, shape index: {}]
  %s5 = inlined_call_operand.vmem [shape: bf16[64,64], index: 5, kind: input, shape index: {}]
  %s6 = inlined_call_operand.vmem [shape: f32[1,64], index: 6, kind: input, shape index: {}]
  %s7 = inlined_call_operand.vmem [shape: f32[2,16,64], index: 7, kind: output, shape index: {}]
  %s8 = sld [smem:[#allocation0]]
  $region61: #{_lambda_.5} parent=0
    _
  %s10 = ssub.s32 1, %s8
  %s11 = scalar_select 0, %s10, %s8
  loop: start=0, step=1, limit=4
  $region2: #{_lambda_.5} parent=0 // loop_pre_header
    _
  $region3: #{_lambda_.5} parent=0 // loop_header
    %s13 = sphi 0, %s17
    %p14 = scmp.ge.s32.totalorder %s13, 4
    %s23 = sphi 0, %s25
    %s26 = sphi 0, %s23
    %s27 = sphi 0, %s26
    %s43 = sphi 0, %s27
    %s47 = sphi 0, %s47
    %s49 = sphi 0, %s47
    %s50 = sphi 0, %s49
    %s64 = sphi 0, %s50
    %s68 = sphi 0, %s68
    %s70 = sphi 0, %s68
    %s71 = sphi 0, %s70
    %s85 = sphi 0, %s71
    %s89 = sphi 0, %s89
    %s91 = sphi 0, %s89
    %s92 = sphi 0, %s91
    %s106 = sphi 0, %s92
    %s110 = sphi 0, %s110
    %s112 = sphi 0, %s110
    %s113 = sphi 0, %s112
    %s127 = sphi 0, %s113
    %s131 = sphi 0, %s131
    %s133 = sphi 0, %s131
    %s134 = sphi 0, %s133
    %s148 = sphi 0, %s134
    %s152 = sphi 0, %s152
    %s154 = sphi 0, %s152
    %s155 = sphi 0, %s154
    %s169 = sphi 0, %s155
    %s175 = sphi 0, %s177
    %s178 = sphi 0, %s175
    %s179 = sphi 0, %s178
    %s195 = sphi 0, %s179
  $region4: #{_lambda_.5} parent=0 // loop_header_branch
    %16 = sbr.rel (%p14) target = $region8
  $region5: #{_lambda_.5} parent=0 // loop_body
    %s18 = ssub.s32 %s13, 1
    %s19 = ssub.s32 %s13, 2
    %s20 = sadd.s32 %s13, 1
    %s21 = ssub.s32 %s13, %s20
    %p22 = scmp.eq.s32.totalorder %s21, 0
    %s24 = sadd.s32 %s23, 1
    %s25 = scalar_select %p22, %s23, %s24
    %p28 = pneg %p22
    %p29 = scmp.eq.s32.totalorder %s13, 1
    %p30 = por %p28, %p29
    %p31 = scmp.ne.s32.totalorder %s23, %s26
    %p32 = scmp.eq.s32.totalorder %s13, 0
    %p33 = por %p31, %p32
    %p34 = scmp.ne.s32.totalorder %s23, %s26
    %p35 = scmp.eq.s32.totalorder %s18, 1
    %p36 = por %p34, %p35
    %p37 = scmp.ne.s32.totalorder %s26, %s27
    %p38 = scmp.eq.s32.totalorder %s18, 0
    %p39 = por %p37, %p38
    %p40 = scmp.ne.s32.totalorder %s26, %s27
    %p41 = scmp.eq.s32.totalorder %s19, 1
    %p42 = por %p40, %p41
    %p44 = scmp.ne.s32.totalorder %s27, %s43
    %p45 = scmp.eq.s32.totalorder %s19, 0
    %p46 = por %p44, %p45
    %s48 = sadd.s32 %s47, 1
    %p51 = scmp.eq.s32.totalorder %s13, 1
    %p52 = scmp.ne.s32.totalorder %s47, %s49
    %p53 = scmp.eq.s32.totalorder %s13, 0
    %p54 = por %p52, %p53
    %p55 = scmp.ne.s32.totalorder %s47, %s49
    %p56 = scmp.eq.s32.totalorder %s18, 1
    %p57 = por %p55, %p56
    %p58 = scmp.ne.s32.totalorder %s49, %s50
    %p59 = scmp.eq.s32.totalorder %s18, 0
    %p60 = por %p58, %p59
    %p61 = scmp.ne.s32.totalorder %s49, %s50
    %p62 = scmp.eq.s32.totalorder %s19, 1
    %p63 = por %p61, %p62
    %p65 = scmp.ne.s32.totalorder %s50, %s64
    %p66 = scmp.eq.s32.totalorder %s19, 0
    %p67 = por %p65, %p66
    %s69 = sadd.s32 %s68, 1
    %p72 = scmp.eq.s32.totalorder %s13, 1
    %p73 = scmp.ne.s32.totalorder %s68, %s70
    %p74 = scmp.eq.s32.totalorder %s13, 0
    %p75 = por %p73, %p74
    %p76 = scmp.ne.s32.totalorder %s68, %s70
    %p77 = scmp.eq.s32.totalorder %s18, 1
    %p78 = por %p76, %p77
    %p79 = scmp.ne.s32.totalorder %s70, %s71
    %p80 = scmp.eq.s32.totalorder %s18, 0
    %p81 = por %p79, %p80
    %p82 = scmp.ne.s32.totalorder %s70, %s71
    %p83 = scmp.eq.s32.totalorder %s19, 1
    %p84 = por %p82, %p83
    %p86 = scmp.ne.s32.totalorder %s71, %s85
    %p87 = scmp.eq.s32.totalorder %s19, 0
    %p88 = por %p86, %p87
    %s90 = sadd.s32 %s89, 1
    %p93 = scmp.eq.s32.totalorder %s13, 1
    %p94 = scmp.ne.s32.totalorder %s89, %s91
    %p95 = scmp.eq.s32.totalorder %s13, 0
    %p96 = por %p94, %p95
    %p97 = scmp.ne.s32.totalorder %s89, %s91
    %p98 = scmp.eq.s32.totalorder %s18, 1
    %p99 = por %p97, %p98
    %p100 = scmp.ne.s32.totalorder %s91, %s92
    %p101 = scmp.eq.s32.totalorder %s18, 0
    %p102 = por %p100, %p101
    %p103 = scmp.ne.s32.totalorder %s91, %s92
    %p104 = scmp.eq.s32.totalorder %s19, 1
    %p105 = por %p103, %p104
    %p107 = scmp.ne.s32.totalorder %s92, %s106
    %p108 = scmp.eq.s32.totalorder %s19, 0
    %p109 = por %p107, %p108
    %s111 = sadd.s32 %s110, 1
    %p114 = scmp.eq.s32.totalorder %s13, 1
    %p115 = scmp.ne.s32.totalorder %s110, %s112
    %p116 = scmp.eq.s32.totalorder %s13, 0
    %p117 = por %p115, %p116
    %p118 = scmp.ne.s32.totalorder %s110, %s112
    %p119 = scmp.eq.s32.totalorder %s18, 1
    %p120 = por %p118, %p119
    %p121 = scmp.ne.s32.totalorder %s112, %s113
    %p122 = scmp.eq.s32.totalorder %s18, 0
    %p123 = por %p121, %p122
    %p124 = scmp.ne.s32.totalorder %s112, %s113
    %p125 = scmp.eq.s32.totalorder %s19, 1
    %p126 = por %p124, %p125
    %p128 = scmp.ne.s32.totalorder %s113, %s127
    %p129 = scmp.eq.s32.totalorder %s19, 0
    %p130 = por %p128, %p129
    %s132 = sadd.s32 %s131, 1
    %p135 = scmp.eq.s32.totalorder %s13, 1
    %p136 = scmp.ne.s32.totalorder %s131, %s133
    %p137 = scmp.eq.s32.totalorder %s13, 0
    %p138 = por %p136, %p137
    %p139 = scmp.ne.s32.totalorder %s131, %s133
    %p140 = scmp.eq.s32.totalorder %s18, 1
    %p141 = por %p139, %p140
    %p142 = scmp.ne.s32.totalorder %s133, %s134
    %p143 = scmp.eq.s32.totalorder %s18, 0
    %p144 = por %p142, %p143
    %p145 = scmp.ne.s32.totalorder %s133, %s134
    %p146 = scmp.eq.s32.totalorder %s19, 1
    %p147 = por %p145, %p146
    %p149 = scmp.ne.s32.totalorder %s134, %s148
    %p150 = scmp.eq.s32.totalorder %s19, 0
    %p151 = por %p149, %p150
    %s153 = sadd.s32 %s152, 1
    %p156 = scmp.eq.s32.totalorder %s13, 1
    %p157 = scmp.ne.s32.totalorder %s152, %s154
    %p158 = scmp.eq.s32.totalorder %s13, 0
    %p159 = por %p157, %p158
    %p160 = scmp.ne.s32.totalorder %s152, %s154
    %p161 = scmp.eq.s32.totalorder %s18, 1
    %p162 = por %p160, %p161
    %p163 = scmp.ne.s32.totalorder %s154, %s155
    %p164 = scmp.eq.s32.totalorder %s18, 0
    %p165 = por %p163, %p164
    %p166 = scmp.ne.s32.totalorder %s154, %s155
    %p167 = scmp.eq.s32.totalorder %s19, 1
    %p168 = por %p166, %p167
    %p170 = scmp.ne.s32.totalorder %s155, %s169
    %p171 = scmp.eq.s32.totalorder %s19, 0
    %p172 = por %p170, %p171
    %s173 = ssub.s32 %s13, %s20
    %p174 = scmp.eq.s32.totalorder %s173, 0
    %s176 = sadd.s32 %s175, 1
    %s177 = scalar_select %p174, %s175, %s176
    %p180 = pneg %p174
    %p181 = scmp.eq.s32.totalorder %s13, 1
    %p182 = por %p180, %p181
    %p183 = scmp.ne.s32.totalorder %s175, %s178
    %p184 = scmp.eq.s32.totalorder %s13, 0
    %p185 = por %p183, %p184
    %p186 = scmp.ne.s32.totalorder %s175, %s178
    %p187 = scmp.eq.s32.totalorder %s18, 1
    %p188 = por %p186, %p187
    %p189 = scmp.ne.s32.totalorder %s178, %s179
    %p190 = scmp.eq.s32.totalorder %s18, 0
    %p191 = por %p189, %p190
    %p192 = scmp.ne.s32.totalorder %s178, %s179
    %p193 = scmp.eq.s32.totalorder %s19, 1
    %p194 = por %p192, %p193
    %p196 = scmp.ne.s32.totalorder %s179, %s195
    %p197 = scmp.eq.s32.totalorder %s19, 0
    %p198 = por %p196, %p197
    %p199 = scmp.le.s32.totalorder 1, %s13
    %p200 = scmp.lt.s32.totalorder %s13, 3
    %p201 = pnand %p199, %p200
    %p202 = pneg %p201
    // Predicated region
    $region9: #{_lambda_.5} parent=5 // pred_check
      _
    $region10: #{_lambda_.5} parent=5 // pred_check_branch
      %204 = sbr.rel (%p201) target = $region12
    $region11: #{_lambda_.5} parent=5 // pred_region
      %s205 = ssub.s32 %s13, 1
      // Predicated region
      $region13: #{_lambda_.5} parent=11 // pred_check
        %p206 = pneg %p60
      $region14: #{_lambda_.5} parent=11 // pred_check_branch
        %208 = sbr.rel (%p206) target = $region16
      $region15: #{_lambda_.5} parent=11 // pred_region
        _
      $region16: #{_lambda_.5} parent=11 // pred_fallthru
        _
      // Predicated region
      $region17: #{_lambda_.5} parent=11 // pred_check
        %p209 = pneg %p81
      $region18: #{_lambda_.5} parent=11 // pred_check_branch
        %211 = sbr.rel (%p209) target = $region20
      $region19: #{_lambda_.5} parent=11 // pred_region
        _
      $region20: #{_lambda_.5} parent=11 // pred_fallthru
        _
      // Predicated region
      $region21: #{_lambda_.5} parent=11 // pred_check
        %p212 = pneg %p102
      $region22: #{_lambda_.5} parent=11 // pred_check_branch
        %214 = sbr.rel (%p212) target = $region24
      $region23: #{_lambda_.5} parent=11 // pred_region
        _
      $region24: #{_lambda_.5} parent=11 // pred_fallthru
        _
      // Predicated region
      $region25: #{_lambda_.5} parent=11 // pred_check
        %p215 = pneg %p123
      $region26: #{_lambda_.5} parent=11 // pred_check_branch
        %217 = sbr.rel (%p215) target = $region28
      $region27: #{_lambda_.5} parent=11 // pred_region
        _
      $region28: #{_lambda_.5} parent=11 // pred_fallthru
        _
      // Predicated region
      $region29: #{_lambda_.5} parent=11 // pred_check
        %p218 = pneg %p144
      $region30: #{_lambda_.5} parent=11 // pred_check_branch
        %220 = sbr.rel (%p218) target = $region32
      $region31: #{_lambda_.5} parent=11 // pred_region
        _
      $region32: #{_lambda_.5} parent=11 // pred_fallthru
        _
      // Predicated region
      $region33: #{_lambda_.5} parent=11 // pred_check
        %p221 = pneg %p165
      $region34: #{_lambda_.5} parent=11 // pred_check_branch
        %223 = sbr.rel (%p221) target = $region36
      $region35: #{_lambda_.5} parent=11 // pred_region
        _
      $region36: #{_lambda_.5} parent=11 // pred_fallthru
        _
    $region12: #{_lambda_.5} parent=5 // pred_fallthru
      _
    %p224 = scmp.lt.s32.totalorder %s13, 2
    // Predicated region
    $region37: #{_lambda_.5} parent=5 // pred_check
      %p225 = pneg %p224
    $region38: #{_lambda_.5} parent=5 // pred_check_branch
      %227 = sbr.rel (%p225) target = $region40
    $region39: #{_lambda_.5} parent=5 // pred_region
      // Predicated region
      $region41: #{_lambda_.5} parent=39 // pred_check
        %p228 = pneg %p33
      $region42: #{_lambda_.5} parent=39 // pred_check_branch
        %230 = sbr.rel (%p228) target = $region44
      $region43: #{_lambda_.5} parent=39 // pred_region
        %p231 = scmp.lt.s32.totalorder %s13, 1
        %s232 = scalar_select %p231, %s13, 1
        %s233 = smul.addr %s232, 2
        %s234 = smul.addr %s233, 8
        %s235 = scalar_lea.vmem %s0, %s234
      $region44: #{_lambda_.5} parent=39 // pred_fallthru
        _
    $region40: #{_lambda_.5} parent=5 // pred_fallthru
      _
    %p236 = scmp.le.s32.totalorder 1, %s13
    %p237 = scmp.lt.s32.totalorder %s13, 3
    %p238 = pnand %p236, %p237
    %p239 = pneg %p238
    // Predicated region
    $region45: #{_lambda_.5} parent=5 // pred_check
      _
    $region46: #{_lambda_.5} parent=5 // pred_check_branch
      %241 = sbr.rel (%p238) target = $region48
    $region47: #{_lambda_.5} parent=5 // pred_region
      %s242 = ssub.s32 %s13, 1
      %p243 = scmp.lt.s32.totalorder %s18, 1
      %s244 = scalar_select %p243, %s18, 1
      %s245 = smul.addr %s244, 2
      %s246 = smul.addr %s245, 8
      %s247 = scalar_lea.vmem %s0, %s246
      %p248 = pneg %p39
      %p249 = pneg %p36
      %p250 = pneg %p60
      %p251 = pneg %p57
      %p252 = pneg %p81
      %p253 = pneg %p78
      %p254 = pneg %p102
      %p255 = pneg %p99
      %p256 = pneg %p123
      %p257 = pneg %p120
      %p258 = pneg %p144
      %p259 = pneg %p141
      %p260 = pneg %p165
      %p261 = pneg %p162
      %p262 = pneg %p191
      %p263 = pneg %p188
      %p264 = scmp.lt.s32.totalorder %s18, 1
      %s265 = scalar_select %p264, %s18, 1
      %s266 = smul.addr %s265, 2
      %s267 = smul.addr %s266, 8
      %s268 = scalar_lea.vmem %s7, %s267
      %p269 = scmp.lt.s32.totalorder %s18, 1
      %s270 = scalar_select %p269, %s18, 1
      %s271 = smul.addr %s270, 2
      %s272 = smul.addr %s271, 8
      %s273 = scalar_lea.vmem %s0, %s272
      %p274 = scmp.lt.s32.totalorder %s18, 1
      %s275 = scalar_select %p274, %s18, 1
      %s276 = smul.addr %s275, 2
      %s277 = smul.addr %s276, 8
      %s278 = scalar_lea.vmem %s7, %s277
      %v280 = vld [vmem:[%s273] sm:$0xff]
      %v281 = vld [vmem:[%s273 + $0x8] sm:$0xff]
      %v282 = vld [vmem:[%s1] sm:$0x1]
      %v283 = vld [vmem:[%s2] sm:$0x1]
      %vm284 = vcmask 523264
      %v285 = vsel %vm284, %v280, 0.0
      %286 = vadd.xlane.f32.xlu0 %v285
      %v287 = vpop.xlane.xlu0 %286
      %v288 = vsel %vm284, %v281, 0.0
      %289 = vadd.xlane.f32.xlu0 %v288
      %v290 = vpop.xlane.xlu0 %289
      %v291 = vrcp.pop 64.0
      %v292 = vmul.f32 %v287, %v291
      %v293 = vmul.f32 %v290, %v291
      %v294 = vsub.f32 %v280, %v292
      %v295 = vsub.f32 %v281, %v293
      %v296 = vmul.f32 %v294, %v294
      %v297 = vmul.f32 %v295, %v295
      %v298 = vsel %vm284, %v296, 0.0
      %299 = vadd.xlane.f32.xlu0 %v298
      %v300 = vpop.xlane.xlu0 %299
      %v301 = vsel %vm284, %v297, 0.0
      %302 = vadd.xlane.f32.xlu0 %v301
      %v303 = vpop.xlane.xlu0 %302
      %v304 = vmul.f32 %v300, %v291
      %v305 = vmul.f32 %v303, %v291
      %v306 = vadd.f32 %v304, 1e-05
      %v307 = vadd.f32 %v305, 1e-05
      %v308 = vrsqrt.pop %v306
      %v309 = vrsqrt.pop %v307
      %v310 = vmul.f32 %v294, %v308
      %v311 = vmul.f32 %v295, %v309
      %v313 = vlaneseq
      %v314 = vshrl.u32 %v313, 7
      %v315 = vsub.s32 0, %v314
      %v316 = vrot.slane %v282, %v315
      %v318 = vmul.f32 %v310, %v316
      %v319 = vmul.f32 %v311, %v316
      %v321 = vlaneseq
      %v322 = vshrl.u32 %v321, 7
      %v323 = vsub.s32 0, %v322
      %v324 = vrot.slane %v283, %v323
      %v326 = vadd.f32 %v318, %v324
      %v327 = vadd.f32 %v319, %v324
      %v328 = vpack.c.bf16 %v327, %v326
      %v329 = vld [vmem:[%s3] sm:$0xff]
      %v330 = vld [vmem:[%s3 + $0x8] sm:$0xff]
      %v331 = vld [vmem:[%s3 + $0x10] sm:$0xff]
      %v332 = vld [vmem:[%s3 + $0x18] sm:$0xff]
      %v333 = vld [vmem:[%s3 + $0x20] sm:$0xff]
      %v334 = vld [vmem:[%s3 + $0x28] sm:$0xff]
      %v335 = vld [vmem:[%s3 + $0x30] sm:$0xff]
      %v336 = vld [vmem:[%s3 + $0x38] sm:$0xff]
      %v337 = vld [vmem:[%s4] sm:$0x3]
      %v339 = vlaneseq
      %v340 = vshrl.u32 %v339, 7
      %v341 = vsub.s32 0, %v340
      %v342 = vrot.slane %v337, %v341
      %v343 = vlaneseq
      %v344 = vshrl.u32 %v343, 7
      %v345 = vsub.s32 1, %v344
      %v346 = vrot.slane %v337, %v345
      %v357 = vunpack.c.l.b16 %v329
      %v358 = vunpack.c.h.b16 %v329
      %v359 = vunpack.c.l.b16 %v330
      %v360 = vunpack.c.h.b16 %v330
      %v361 = vunpack.c.l.b16 %v331
      %v362 = vunpack.c.h.b16 %v331
      %v363 = vunpack.c.l.b16 %v332
      %v364 = vunpack.c.h.b16 %v332
      %v365 = vunpack.c.l.b16 %v333
      %v366 = vunpack.c.h.b16 %v333
      %v367 = vunpack.c.l.b16 %v334
      %v368 = vunpack.c.h.b16 %v334
      %v369 = vunpack.c.l.b16 %v335
      %v370 = vunpack.c.h.b16 %v335
      %v371 = vunpack.c.l.b16 %v336
      %v372 = vunpack.c.h.b16 %v336
      %v373 = vpack.c.b16 %v359, %v357
      %v374 = vpack.c.b16 %v360, %v358
      %v375 = vpack.c.b16 %v363, %v361
      %v376 = vpack.c.b16 %v364, %v362
      %v377 = vpack.c.b16 %v367, %v365
      %v378 = vpack.c.b16 %v368, %v366
      %v379 = vpack.c.b16 %v371, %v369
      %v380 = vpack.c.b16 %v372, %v370
      %v390 = vsel %vm284, %v328, 0
      %392 = vmatprep.subr.bf16.mxu0 0
      %393 = vmatpush1.bf16.msra.mxu0 0
      %394 = vmatprep.subr.bf16.mxu0 0
      %395 = vmatpush1.bf16.msra.mxu0 0
      %396 = vmatprep.subr.bf16.mxu0 0
      %397 = vmatpush1.bf16.msra.mxu0 0
      %398 = vmatprep.subr.bf16.mxu0 0
      %399 = vmatpush1.bf16.msra.mxu0 0
      %400 = vmatprep.subr.bf16.mxu0 %v380
      %401 = vmatpush1.bf16.msra.mxu0 %v379
      %402 = vmatprep.subr.bf16.mxu0 %v378
      %403 = vmatpush1.bf16.msra.mxu0 %v377
      %404 = vmatprep.subr.bf16.mxu0 %v376
      %405 = vmatpush1.bf16.msra.mxu0 %v375
      %406 = vmatprep.subr.bf16.mxu0 %v374
      %407 = vmatpush1.bf16.msra.mxu0 %v373
      %408 = vmatprep.subr.bf16.mxu0 0
      %409 = vmatpush2.bf16.msra.mxu0 0
      %410 = vmatprep.subr.bf16.mxu0 0
      %411 = vmatpush2.bf16.msra.mxu0 0
      %412 = vmatprep.subr.bf16.mxu0 0
      %413 = vmatpush2.bf16.msra.mxu0 0
      %414 = vmatprep.subr.bf16.mxu0 0
      %415 = vmatpush2.bf16.msra.mxu0 0
      %416 = vmatprep.subr.bf16.mxu0 0
      %417 = vmatpush2.bf16.msra.mxu0 0
      %418 = vmatprep.subr.bf16.mxu0 0
      %419 = vmatpush2.bf16.msra.mxu0 0
      %420 = vmatprep.subr.bf16.mxu0 0
      %421 = vmatpush2.bf16.msra.mxu0 0
      %422 = vmatprep.subr.bf16.mxu0 0
      %423 = vmatpush2.bf16.msra.mxu0 0
      %424 = vmatprep.mubr.bf16.mxu0 0
      %425 = vmatmul.mubr.bf16.gmra.mxu0 %v390
      %v426 = vpop.f32.mrf.mxu0
      %v427 = vadd.f32 %v342, %v426
      %v428 = vpop.f32.mrf.mxu0
      %v429 = vadd.f32 %v346, %v428
      %v430 = vpop.f32.mrf.mxu0
      %v431 = vadd.f32 %v342, %v430
      %v432 = vpop.f32.mrf.mxu0
      %v433 = vadd.f32 %v346, %v432
      %434 = vdwg.mxu0
      %v435 = vpack.c.bf16 %v431, %v427
      %v436 = vpack.c.bf16 %v433, %v429
      %438 = vrot.lane.b32.xlu0 %v435, 112
      %v439 = vpop.permute.xlu0 %438
      %440 = vrot.lane.b32.xlu0 %v435, 96
      %v441 = vpop.permute.xlu0 %440
      %442 = vrot.lane.b32.xlu0 %v435, 80
      %v443 = vpop.permute.xlu0 %442
      %445 = vrot.lane.b32.xlu0 %v436, 112
      %v446 = vpop.permute.xlu0 %445
      %448 = vrot.lane.b32.xlu0 %v436, 96
      %v449 = vpop.permute.xlu0 %448
      %451 = vrot.lane.b32.xlu0 %v436, 80
      %v452 = vpop.permute.xlu0 %451
      %454 = vrot.lane.b32.xlu0 %v435, 64
      %v455 = vpop.permute.xlu0 %454
      %vm456 = vcmask 130048
      %v458 = vsel %vm456, %v435, 0
      %v461 = vsel %vm456, %v455, 0
      %463 = vmatprep.subr.bf16.mxu0 0
      %464 = vmatpush1.bf16.xpose.msra.mxu0 0
      %465 = vmatprep.subr.bf16.mxu0 0
      %466 = vmatpush1.bf16.xpose.msra.mxu0 0
      %467 = vmatprep.subr.bf16.mxu0 0
      %468 = vmatpush1.bf16.xpose.msra.mxu0 0
      %469 = vmatprep.subr.bf16.mxu0 0
      %470 = vmatpush1.bf16.xpose.msra.mxu0 0
      %471 = vmatprep.subr.bf16.mxu0 0
      %472 = vmatpush1.bf16.xpose.msra.mxu0 0
      %473 = vmatprep.subr.bf16.mxu0 0
      %474 = vmatpush1.bf16.xpose.msra.mxu0 0
      %475 = vmatprep.subr.bf16.mxu0 0
      %476 = vmatpush1.bf16.xpose.msra.mxu0 0
      %477 = vmatprep.subr.bf16.mxu0 0
      %478 = vmatpush1.bf16.xpose.msra.mxu0 %v461
      %479 = vmatprep.subr.bf16.mxu0 0
      %480 = vmatpush2.bf16.xpose.msra.mxu0 0
      %481 = vmatprep.subr.bf16.mxu0 0
      %482 = vmatpush2.bf16.xpose.msra.mxu0 0
      %483 = vmatprep.subr.bf16.mxu0 0
      %484 = vmatpush2.bf16.xpose.msra.mxu0 0
      %485 = vmatprep.subr.bf16.mxu0 0
      %486 = vmatpush2.bf16.xpose.msra.mxu0 0
      %487 = vmatprep.subr.bf16.mxu0 0
      %488 = vmatpush2.bf16.xpose.msra.mxu0 0
      %489 = vmatprep.subr.bf16.mxu0 0
      %490 = vmatpush2.bf16.xpose.msra.mxu0 0
      %491 = vmatprep.subr.bf16.mxu0 0
      %492 = vmatpush2.bf16.xpose.msra.mxu0 0
      %493 = vmatprep.subr.bf16.mxu0 0
      %494 = vmatpush2.bf16.xpose.msra.mxu0 0
      %495 = vmatprep.mubr.bf16.mxu0 0
      %496 = vmatmul.mubr.bf16.gmra.mxu0 %v458
      %v497 = vpop.f32.mrf.mxu0
      %v498 = vadd.f32 0.0, %v497
      %v499 = vpop.f32.mrf.mxu0
      %v500 = vpop.f32.mrf.mxu0
      %v501 = vadd.f32 0.0, %v500
      %v502 = vpop.f32.mrf.mxu0
      %503 = vdwg.mxu0
      %504 = vrot.lane.b32.xlu0 %v439, 64
      %v505 = vpop.permute.xlu0 %504
      %v507 = vsel %vm456, %v439, 0
      %v510 = vsel %vm456, %v505, 0
      %512 = vmatprep.subr.bf16.mxu0 0
      %513 = vmatpush1.bf16.xpose.msra.mxu0 0
      %514 = vmatprep.subr.bf16.mxu0 0
      %515 = vmatpush1.bf16.xpose.msra.mxu0 0
      %516 = vmatprep.subr.bf16.mxu0 0
      %517 = vmatpush1.bf16.xpose.msra.mxu0 0
      %518 = vmatprep.subr.bf16.mxu0 0
      %519 = vmatpush1.bf16.xpose.msra.mxu0 0
      %520 = vmatprep.subr.bf16.mxu0 0
      %521 = vmatpush1.bf16.xpose.msra.mxu0 0
      %522 = vmatprep.subr.bf16.mxu0 0
      %523 = vmatpush1.bf16.xpose.msra.mxu0 0
      %524 = vmatprep.subr.bf16.mxu0 0
      %525 = vmatpush1.bf16.xpose.msra.mxu0 0
      %526 = vmatprep.subr.bf16.mxu0 0
      %527 = vmatpush1.bf16.xpose.msra.mxu0 %v510
      %528 = vmatprep.subr.bf16.mxu0 0
      %529 = vmatpush2.bf16.xpose.msra.mxu0 0
      %530 = vmatprep.subr.bf16.mxu0 0
      %531 = vmatpush2.bf16.xpose.msra.mxu0 0
      %532 = vmatprep.subr.bf16.mxu0 0
      %533 = vmatpush2.bf16.xpose.msra.mxu0 0
      %534 = vmatprep.subr.bf16.mxu0 0
      %535 = vmatpush2.bf16.xpose.msra.mxu0 0
      %536 = vmatprep.subr.bf16.mxu0 0
      %537 = vmatpush2.bf16.xpose.msra.mxu0 0
      %538 = vmatprep.subr.bf16.mxu0 0
      %539 = vmatpush2.bf16.xpose.msra.mxu0 0
      %540 = vmatprep.subr.bf16.mxu0 0
      %541 = vmatpush2.bf16.xpose.msra.mxu0 0
      %542 = vmatprep.subr.bf16.mxu0 0
      %543 = vmatpush2.bf16.xpose.msra.mxu0 0
      %544 = vmatprep.mubr.bf16.mxu0 0
      %545 = vmatmul.mubr.bf16.gmra.mxu0 %v507
      %v546 = vpop.f32.mrf.mxu0
      %v547 = vadd.f32 0.0, %v546
      %v548 = vpop.f32.mrf.mxu0
      %v549 = vpop.f32.mrf.mxu0
      %v550 = vadd.f32 0.0, %v549
      %v551 = vpop.f32.mrf.mxu0
      %552 = vdwg.mxu0
      %553 = vrot.lane.b32.xlu0 %v441, 64
      %v554 = vpop.permute.xlu0 %553
      %v556 = vsel %vm456, %v441, 0
      %v559 = vsel %vm456, %v554, 0
      %561 = vmatprep.subr.bf16.mxu0 0
      %562 = vmatpush1.bf16.xpose.msra.mxu0 0
      %563 = vmatprep.subr.bf16.mxu0 0
      %564 = vmatpush1.bf16.xpose.msra.mxu0 0
      %565 = vmatprep.subr.bf16.mxu0 0
      %566 = vmatpush1.bf16.xpose.msra.mxu0 0
      %567 = vmatprep.subr.bf16.mxu0 0
      %568 = vmatpush1.bf16.xpose.msra.mxu0 0
      %569 = vmatprep.subr.bf16.mxu0 0
      %570 = vmatpush1.bf16.xpose.msra.mxu0 0
      %571 = vmatprep.subr.bf16.mxu0 0
      %572 = vmatpush1.bf16.xpose.msra.mxu0 0
      %573 = vmatprep.subr.bf16.mxu0 0
      %574 = vmatpush1.bf16.xpose.msra.mxu0 0
      %575 = vmatprep.subr.bf16.mxu0 0
      %576 = vmatpush1.bf16.xpose.msra.mxu0 %v559
      %577 = vmatprep.subr.bf16.mxu0 0
      %578 = vmatpush2.bf16.xpose.msra.mxu0 0
      %579 = vmatprep.subr.bf16.mxu0 0
      %580 = vmatpush2.bf16.xpose.msra.mxu0 0
      %581 = vmatprep.subr.bf16.mxu0 0
      %582 = vmatpush2.bf16.xpose.msra.mxu0 0
      %583 = vmatprep.subr.bf16.mxu0 0
      %584 = vmatpush2.bf16.xpose.msra.mxu0 0
      %585 = vmatprep.subr.bf16.mxu0 0
      %586 = vmatpush2.bf16.xpose.msra.mxu0 0
      %587 = vmatprep.subr.bf16.mxu0 0
      %588 = vmatpush2.bf16.xpose.msra.mxu0 0
      %589 = vmatprep.subr.bf16.mxu0 0
      %590 = vmatpush2.bf16.xpose.msra.mxu0 0
      %591 = vmatprep.subr.bf16.mxu0 0
      %592 = vmatpush2.bf16.xpose.msra.mxu0 0
      %593 = vmatprep.mubr.bf16.mxu0 0
      %594 = vmatmul.mubr.bf16.gmra.mxu0 %v556
      %v595 = vpop.f32.mrf.mxu0
      %v596 = vadd.f32 0.0, %v595
      %v597 = vpop.f32.mrf.mxu0
      %v598 = vpop.f32.mrf.mxu0
      %v599 = vadd.f32 0.0, %v598
      %v600 = vpop.f32.mrf.mxu0
      %601 = vdwg.mxu0
      %602 = vrot.lane.b32.xlu0 %v443, 64
      %v603 = vpop.permute.xlu0 %602
      %v605 = vsel %vm456, %v443, 0
      %v608 = vsel %vm456, %v603, 0
      %610 = vmatprep.subr.bf16.mxu0 0
      %611 = vmatpush1.bf16.xpose.msra.mxu0 0
      %612 = vmatprep.subr.bf16.mxu0 0
      %613 = vmatpush1.bf16.xpose.msra.mxu0 0
      %614 = vmatprep.subr.bf16.mxu0 0
      %615 = vmatpush1.bf16.xpose.msra.mxu0 0
      %616 = vmatprep.subr.bf16.mxu0 0
      %617 = vmatpush1.bf16.xpose.msra.mxu0 0
      %618 = vmatprep.subr.bf16.mxu0 0
      %619 = vmatpush1.bf16.xpose.msra.mxu0 0
      %620 = vmatprep.subr.bf16.mxu0 0
      %621 = vmatpush1.bf16.xpose.msra.mxu0 0
      %622 = vmatprep.subr.bf16.mxu0 0
      %623 = vmatpush1.bf16.xpose.msra.mxu0 0
      %624 = vmatprep.subr.bf16.mxu0 0
      %625 = vmatpush1.bf16.xpose.msra.mxu0 %v608
      %626 = vmatprep.subr.bf16.mxu0 0
      %627 = vmatpush2.bf16.xpose.msra.mxu0 0
      %628 = vmatprep.subr.bf16.mxu0 0
      %629 = vmatpush2.bf16.xpose.msra.mxu0 0
      %630 = vmatprep.subr.bf16.mxu0 0
      %631 = vmatpush2.bf16.xpose.msra.mxu0 0
      %632 = vmatprep.subr.bf16.mxu0 0
      %633 = vmatpush2.bf16.xpose.msra.mxu0 0
      %634 = vmatprep.subr.bf16.mxu0 0
      %635 = vmatpush2.bf16.xpose.msra.mxu0 0
      %636 = vmatprep.subr.bf16.mxu0 0
      %637 = vmatpush2.bf16.xpose.msra.mxu0 0
      %638 = vmatprep.subr.bf16.mxu0 0
      %639 = vmatpush2.bf16.xpose.msra.mxu0 0
      %640 = vmatprep.subr.bf16.mxu0 0
      %641 = vmatpush2.bf16.xpose.msra.mxu0 0
      %642 = vmatprep.mubr.bf16.mxu0 0
      %643 = vmatmul.mubr.bf16.gmra.mxu0 %v605
      %v644 = vpop.f32.mrf.mxu0
      %v645 = vadd.f32 0.0, %v644
      %v646 = vpop.f32.mrf.mxu0
      %v647 = vpop.f32.mrf.mxu0
      %v648 = vadd.f32 0.0, %v647
      %v649 = vpop.f32.mrf.mxu0
      %650 = vdwg.mxu0
      %v651 = vmul.f32 %v498, 0.25
      %v652 = vmul.f32 %v501, 0.25
      %v653 = vmul.f32 %v547, 0.25
      %v654 = vmul.f32 %v550, 0.25
      %v655 = vmul.f32 %v596, 0.25
      %v656 = vmul.f32 %v599, 0.25
      %v657 = vmul.f32 %v645, 0.25
      %v658 = vmul.f32 %v648, 0.25
      %v659 = vlaneseq
      %v660 = vshrl.u32 %v659, 7
      %v661 = vadd.s32 %v660, 8
      %v662 = vlaneseq
      %v663 = vand.u32 %v662, 127
      %vm664 = vcmp.le.s32.totalorder %v663, %v660
      %vm665 = vcmp.le.s32.totalorder %v663, %v661
      %v666 = vsel %vm664, 1, 0
      %v667 = vsel %vm665, 1, 0
      %vm668 = vcmp.eq.s32.totalorder %v666, 1
      %vm669 = vcmp.eq.s32.totalorder %v667, 1
      %v670 = vsel %vm668, %v651, -inf
      %v671 = vsel %vm669, %v652, -inf
      %v672 = vsel %vm668, %v653, -inf
      %v673 = vsel %vm669, %v654, -inf
      %v674 = vsel %vm668, %v655, -inf
      %v675 = vsel %vm669, %v656, -inf
      %v676 = vsel %vm668, %v657, -inf
      %v677 = vsel %vm669, %v658, -inf
      %v678 = vsel %vm456, %v670, -inf
      %679 = vmax.xlane.f32.xlu0 %v678
      %v680 = vpop.xlane.xlu0 %679
      %v681 = vsel %vm456, %v671, -inf
      %682 = vmax.xlane.f32.xlu0 %v681
      %v683 = vpop.xlane.xlu0 %682
      %v684 = vsel %vm456, %v672, -inf
      %685 = vmax.xlane.f32.xlu0 %v684
      %v686 = vpop.xlane.xlu0 %685
      %v687 = vsel %vm456, %v673, -inf
      %688 = vmax.xlane.f32.xlu0 %v687
      %v689 = vpop.xlane.xlu0 %688
      %v690 = vsel %vm456, %v674, -inf
      %691 = vmax.xlane.f32.xlu0 %v690
      %v692 = vpop.xlane.xlu0 %691
      %v693 = vsel %vm456, %v675, -inf
      %694 = vmax.xlane.f32.xlu0 %v693
      %v695 = vpop.xlane.xlu0 %694
      %v696 = vsel %vm456, %v676, -inf
      %697 = vmax.xlane.f32.xlu0 %v696
      %v698 = vpop.xlane.xlu0 %697
      %v699 = vsel %vm456, %v677, -inf
      %700 = vmax.xlane.f32.xlu0 %v699
      %v701 = vpop.xlane.xlu0 %700
      %v702 = vsub.f32 %v670, %v680
      %v703 = vsub.f32 %v671, %v683
      %v704 = vsub.f32 %v672, %v686
      %v705 = vsub.f32 %v673, %v689
      %v706 = vsub.f32 %v674, %v692
      %v707 = vsub.f32 %v675, %v695
      %v708 = vsub.f32 %v676, %v698
      %v709 = vsub.f32 %v677, %v701
      %v710 = vmul.f32 %v702, 1.442695
      %v711 = vpow.pop %v710
      %v712 = vmul.f32 %v703, 1.442695
      %v713 = vpow.pop %v712
      %v714 = vmul.f32 %v704, 1.442695
      %v715 = vpow.pop %v714
      %v716 = vmul.f32 %v705, 1.442695
      %v717 = vpow.pop %v716
      %v718 = vmul.f32 %v706, 1.442695
      %v719 = vpow.pop %v718
      %v720 = vmul.f32 %v707, 1.442695
      %v721 = vpow.pop %v720
      %v722 = vmul.f32 %v708, 1.442695
      %v723 = vpow.pop %v722
      %v724 = vmul.f32 %v709, 1.442695
      %v725 = vpow.pop %v724
      %v726 = vsel %vm456, %v711, 0.0
      %727 = vadd.xlane.f32.xlu0 %v726
      %v728 = vpop.xlane.xlu0 %727
      %v729 = vsel %vm456, %v713, 0.0
      %730 = vadd.xlane.f32.xlu0 %v729
      %v731 = vpop.xlane.xlu0 %730
      %v732 = vsel %vm456, %v715, 0.0
      %733 = vadd.xlane.f32.xlu0 %v732
      %v734 = vpop.xlane.xlu0 %733
      %v735 = vsel %vm456, %v717, 0.0
      %736 = vadd.xlane.f32.xlu0 %v735
      %v737 = vpop.xlane.xlu0 %736
      %v738 = vsel %vm456, %v719, 0.0
      %739 = vadd.xlane.f32.xlu0 %v738
      %v740 = vpop.xlane.xlu0 %739
      %v741 = vsel %vm456, %v721, 0.0
      %742 = vadd.xlane.f32.xlu0 %v741
      %v743 = vpop.xlane.xlu0 %742
      %v744 = vsel %vm456, %v723, 0.0
      %745 = vadd.xlane.f32.xlu0 %v744
      %v746 = vpop.xlane.xlu0 %745
      %v747 = vsel %vm456, %v725, 0.0
      %748 = vadd.xlane.f32.xlu0 %v747
      %v749 = vpop.xlane.xlu0 %748
      %v750 = vpack.c.bf16 %v713, %v711
      %v751 = vpack.c.bf16 %v717, %v715
      %v752 = vpack.c.bf16 %v721, %v719
      %v753 = vpack.c.bf16 %v725, %v723
      %v755 = vsel %vm456, %v750, 0
      %757 = vmatprep.subr.bf16.mxu0 0
      %758 = vmatpush1.bf16.msra.mxu0 0
      %759 = vmatprep.subr.bf16.mxu0 0
      %760 = vmatpush1.bf16.msra.mxu0 0
      %761 = vmatprep.subr.bf16.mxu0 0
      %762 = vmatpush1.bf16.msra.mxu0 0
      %763 = vmatprep.subr.bf16.mxu0 0
      %764 = vmatpush1.bf16.msra.mxu0 0
      %765 = vmatprep.subr.bf16.mxu0 0
      %766 = vmatpush1.bf16.msra.mxu0 0
      %767 = vmatprep.subr.bf16.mxu0 0
      %768 = vmatpush1.bf16.msra.mxu0 0
      %769 = vmatprep.subr.bf16.mxu0 0
      %770 = vmatpush1.bf16.msra.mxu0 0
      %771 = vmatprep.subr.bf16.mxu0 0
      %772 = vmatpush1.bf16.msra.mxu0 %v436
      %773 = vmatprep.subr.bf16.mxu0 0
      %774 = vmatpush2.bf16.msra.mxu0 0
      %775 = vmatprep.subr.bf16.mxu0 0
      %776 = vmatpush2.bf16.msra.mxu0 0
      %777 = vmatprep.subr.bf16.mxu0 0
      %778 = vmatpush2.bf16.msra.mxu0 0
      %779 = vmatprep.subr.bf16.mxu0 0
      %780 = vmatpush2.bf16.msra.mxu0 0
      %781 = vmatprep.subr.bf16.mxu0 0
      %782 = vmatpush2.bf16.msra.mxu0 0
      %783 = vmatprep.subr.bf16.mxu0 0
      %784 = vmatpush2.bf16.msra.mxu0 0
      %785 = vmatprep.subr.bf16.mxu0 0
      %786 = vmatpush2.bf16.msra.mxu0 0
      %787 = vmatprep.subr.bf16.mxu0 0
      %788 = vmatpush2.bf16.msra.mxu0 0
      %789 = vmatprep.mubr.bf16.mxu0 0
      %790 = vmatmul.mubr.bf16.gmra.mxu0 %v755
      %v791 = vpop.f32.mrf.mxu0
      %v792 = vadd.f32 0.0, %v791
      %v793 = vpop.f32.mrf.mxu0
      %v794 = vpop.f32.mrf.mxu0
      %v795 = vadd.f32 0.0, %v794
      %v796 = vpop.f32.mrf.mxu0
      %797 = vdwg.mxu0
      %v799 = vsel %vm456, %v751, 0
      %801 = vmatprep.subr.bf16.mxu0 0
      %802 = vmatpush1.bf16.msra.mxu0 0
      %803 = vmatprep.subr.bf16.mxu0 0
      %804 = vmatpush1.bf16.msra.mxu0 0
      %805 = vmatprep.subr.bf16.mxu0 0
      %806 = vmatpush1.bf16.msra.mxu0 0
      %807 = vmatprep.subr.bf16.mxu0 0
      %808 = vmatpush1.bf16.msra.mxu0 0
      %809 = vmatprep.subr.bf16.mxu0 0
      %810 = vmatpush1.bf16.msra.mxu0 0
      %811 = vmatprep.subr.bf16.mxu0 0
      %812 = vmatpush1.bf16.msra.mxu0 0
      %813 = vmatprep.subr.bf16.mxu0 0
      %814 = vmatpush1.bf16.msra.mxu0 0
      %815 = vmatprep.subr.bf16.mxu0 0
      %816 = vmatpush1.bf16.msra.mxu0 %v446
      %817 = vmatprep.subr.bf16.mxu0 0
      %818 = vmatpush2.bf16.msra.mxu0 0
      %819 = vmatprep.subr.bf16.mxu0 0
      %820 = vmatpush2.bf16.msra.mxu0 0
      %821 = vmatprep.subr.bf16.mxu0 0
      %822 = vmatpush2.bf16.msra.mxu0 0
      %823 = vmatprep.subr.bf16.mxu0 0
      %824 = vmatpush2.bf16.msra.mxu0 0
      %825 = vmatprep.subr.bf16.mxu0 0
      %826 = vmatpush2.bf16.msra.mxu0 0
      %827 = vmatprep.subr.bf16.mxu0 0
      %828 = vmatpush2.bf16.msra.mxu0 0
      %829 = vmatprep.subr.bf16.mxu0 0
      %830 = vmatpush2.bf16.msra.mxu0 0
      %831 = vmatprep.subr.bf16.mxu0 0
      %832 = vmatpush2.bf16.msra.mxu0 0
      %833 = vmatprep.mubr.bf16.mxu0 0
      %834 = vmatmul.mubr.bf16.gmra.mxu0 %v799
      %v835 = vpop.f32.mrf.mxu0
      %v836 = vadd.f32 0.0, %v835
      %v837 = vpop.f32.mrf.mxu0
      %v838 = vpop.f32.mrf.mxu0
      %v839 = vadd.f32 0.0, %v838
      %v840 = vpop.f32.mrf.mxu0
      %841 = vdwg.mxu0
      %v843 = vsel %vm456, %v752, 0
      %845 = vmatprep.subr.bf16.mxu0 0
      %846 = vmatpush1.bf16.msra.mxu0 0
      %847 = vmatprep.subr.bf16.mxu0 0
      %848 = vmatpush1.bf16.msra.mxu0 0
      %849 = vmatprep.subr.bf16.mxu0 0
      %850 = vmatpush1.bf16.msra.mxu0 0
      %851 = vmatprep.subr.bf16.mxu0 0
      %852 = vmatpush1.bf16.msra.mxu0 0
      %853 = vmatprep.subr.bf16.mxu0 0
      %854 = vmatpush1.bf16.msra.mxu0 0
      %855 = vmatprep.subr.bf16.mxu0 0
      %856 = vmatpush1.bf16.msra.mxu0 0
      %857 = vmatprep.subr.bf16.mxu0 0
      %858 = vmatpush1.bf16.msra.mxu0 0
      %859 = vmatprep.subr.bf16.mxu0 0
      %860 = vmatpush1.bf16.msra.mxu0 %v449
      %861 = vmatprep.subr.bf16.mxu0 0
      %862 = vmatpush2.bf16.msra.mxu0 0
      %863 = vmatprep.subr.bf16.mxu0 0
      %864 = vmatpush2.bf16.msra.mxu0 0
      %865 = vmatprep.subr.bf16.mxu0 0
      %866 = vmatpush2.bf16.msra.mxu0 0
      %867 = vmatprep.subr.bf16.mxu0 0
      %868 = vmatpush2.bf16.msra.mxu0 0
      %869 = vmatprep.subr.bf16.mxu0 0
      %870 = vmatpush2.bf16.msra.mxu0 0
      %871 = vmatprep.subr.bf16.mxu0 0
      %872 = vmatpush2.bf16.msra.mxu0 0
      %873 = vmatprep.subr.bf16.mxu0 0
      %874 = vmatpush2.bf16.msra.mxu0 0
      %875 = vmatprep.subr.bf16.mxu0 0
      %876 = vmatpush2.bf16.msra.mxu0 0
      %877 = vmatprep.mubr.bf16.mxu0 0
      %878 = vmatmul.mubr.bf16.gmra.mxu0 %v843
      %v879 = vpop.f32.mrf.mxu0
      %v880 = vadd.f32 0.0, %v879
      %v881 = vpop.f32.mrf.mxu0
      %v882 = vpop.f32.mrf.mxu0
      %v883 = vadd.f32 0.0, %v882
      %v884 = vpop.f32.mrf.mxu0
      %885 = vdwg.mxu0
      %v887 = vsel %vm456, %v753, 0
      %889 = vmatprep.subr.bf16.mxu0 0
      %890 = vmatpush1.bf16.msra.mxu0 0
      %891 = vmatprep.subr.bf16.mxu0 0
      %892 = vmatpush1.bf16.msra.mxu0 0
      %893 = vmatprep.subr.bf16.mxu0 0
      %894 = vmatpush1.bf16.msra.mxu0 0
      %895 = vmatprep.subr.bf16.mxu0 0
      %896 = vmatpush1.bf16.msra.mxu0 0
      %897 = vmatprep.subr.bf16.mxu0 0
      %898 = vmatpush1.bf16.msra.mxu0 0
      %899 = vmatprep.subr.bf16.mxu0 0
      %900 = vmatpush1.bf16.msra.mxu0 0
      %901 = vmatprep.subr.bf16.mxu0 0
      %902 = vmatpush1.bf16.msra.mxu0 0
      %903 = vmatprep.subr.bf16.mxu0 0
      %904 = vmatpush1.bf16.msra.mxu0 %v452
      %905 = vmatprep.subr.bf16.mxu0 0
      %906 = vmatpush2.bf16.msra.mxu0 0
      %907 = vmatprep.subr.bf16.mxu0 0
      %908 = vmatpush2.bf16.msra.mxu0 0
      %909 = vmatprep.subr.bf16.mxu0 0
      %910 = vmatpush2.bf16.msra.mxu0 0
      %911 = vmatprep.subr.bf16.mxu0 0
      %912 = vmatpush2.bf16.msra.mxu0 0
      %913 = vmatprep.subr.bf16.mxu0 0
      %914 = vmatpush2.bf16.msra.mxu0 0
      %915 = vmatprep.subr.bf16.mxu0 0
      %916 = vmatpush2.bf16.msra.mxu0 0
      %917 = vmatprep.subr.bf16.mxu0 0
      %918 = vmatpush2.bf16.msra.mxu0 0
      %919 = vmatprep.subr.bf16.mxu0 0
      %920 = vmatpush2.bf16.msra.mxu0 0
      %921 = vmatprep.mubr.bf16.mxu0 0
      %922 = vmatmul.mubr.bf16.gmra.mxu0 %v887
      %v923 = vpop.f32.mrf.mxu0
      %v924 = vadd.f32 0.0, %v923
      %v925 = vpop.f32.mrf.mxu0
      %v926 = vpop.f32.mrf.mxu0
      %v927 = vadd.f32 0.0, %v926
      %v928 = vpop.f32.mrf.mxu0
      %929 = vdwg.mxu0
      %v930 = vrcp.pop %v728
      %v931 = vrcp.pop %v731
      %v932 = vrcp.pop %v734
      %v933 = vrcp.pop %v737
      %v934 = vrcp.pop %v740
      %v935 = vrcp.pop %v743
      %v936 = vrcp.pop %v746
      %v937 = vrcp.pop %v749
      %v938 = vmul.f32 %v792, %v930
      %v939 = vmul.f32 %v795, %v931
      %v940 = vmul.f32 %v836, %v932
      %v941 = vmul.f32 %v839, %v933
      %v942 = vmul.f32 %v880, %v934
      %v943 = vmul.f32 %v883, %v935
      %v944 = vmul.f32 %v924, %v936
      %v945 = vmul.f32 %v927, %v937
      %948 = vrot.lane.b32.xlu0 %v940, 16
      %v949 = vpop.permute.xlu0 %948
      %950 = vrot.lane.b32.xlu0 %v941, 16
      %v951 = vpop.permute.xlu0 %950
      %956 = vrot.lane.b32.xlu0 %v942, 32
      %v957 = vpop.permute.xlu0 %956
      %958 = vrot.lane.b32.xlu0 %v943, 32
      %v959 = vpop.permute.xlu0 %958
      %964 = vrot.lane.b32.xlu0 %v944, 48
      %v965 = vpop.permute.xlu0 %964
      %966 = vrot.lane.b32.xlu0 %v945, 48
      %v967 = vpop.permute.xlu0 %966
      %v970 = vsel %vm456, %v938, %v949
      %v971 = vsel %vm456, %v939, %v951
      %vm972 = vcmask 261120
      %v973 = vsel %vm972, %v970, %v957
      %v974 = vsel %vm972, %v971, %v959
      %vm975 = vcmask 392192
      %v976 = vsel %vm975, %v973, %v965
      %v977 = vsel %vm975, %v974, %v967
      %v978 = vpack.c.bf16 %v977, %v976
      %v979 = vld [vmem:[%s5] sm:$0xf]
      %v980 = vld [vmem:[%s5 + $0x4] sm:$0xf]
      %v981 = vld [vmem:[%s5 + $0x8] sm:$0xf]
      %v982 = vld [vmem:[%s5 + $0xc] sm:$0xf]
      %v983 = vld [vmem:[%s5 + $0x10] sm:$0xf]
      %v984 = vld [vmem:[%s5 + $0x14] sm:$0xf]
      %v985 = vld [vmem:[%s5 + $0x18] sm:$0xf]
      %v986 = vld [vmem:[%s5 + $0x1c] sm:$0xf]
      %v987 = vld [vmem:[%s6] sm:$0x1]
      %v989 = vlaneseq
      %v990 = vshrl.u32 %v989, 7
      %v991 = vsub.s32 0, %v990
      %v992 = vrot.slane %v987, %v991
      %v1002 = vunpack.c.l.b16 %v979
      %v1003 = vunpack.c.l.b16 %v980
      %v1004 = vunpack.c.l.b16 %v981
      %v1005 = vunpack.c.l.b16 %v982
      %v1006 = vunpack.c.l.b16 %v983
      %v1007 = vunpack.c.l.b16 %v984
      %v1008 = vunpack.c.l.b16 %v985
      %v1009 = vunpack.c.l.b16 %v986
      %v1010 = vpack.c.b16 %v1003, %v1002
      %v1011 = vpack.c.b16 %v1005, %v1004
      %v1012 = vpack.c.b16 %v1007, %v1006
      %v1013 = vpack.c.b16 %v1009, %v1008
      %v1019 = vsel %vm284, %v978, 0
      %1021 = vmatprep.subr.bf16.mxu0 0
      %1022 = vmatpush1.bf16.msra.mxu0 0
      %1023 = vmatprep.subr.bf16.mxu0 0
      %1024 = vmatpush1.bf16.msra.mxu0 0
      %1025 = vmatprep.subr.bf16.mxu0 0
      %1026 = vmatpush1.bf16.msra.mxu0 0
      %1027 = vmatprep.subr.bf16.mxu0 0
      %1028 = vmatpush1.bf16.msra.mxu0 0
      %1029 = vmatprep.subr.bf16.mxu0 0
      %1030 = vmatpush1.bf16.msra.mxu0 %v1013
      %1031 = vmatprep.subr.bf16.mxu0 0
      %1032 = vmatpush1.bf16.msra.mxu0 %v1012
      %1033 = vmatprep.subr.bf16.mxu0 0
      %1034 = vmatpush1.bf16.msra.mxu0 %v1011
      %1035 = vmatprep.subr.bf16.mxu0 0
      %1036 = vmatpush1.bf16.msra.mxu0 %v1010
      %1037 = vmatprep.subr.bf16.mxu0 0
      %1038 = vmatpush2.bf16.msra.mxu0 0
      %1039 = vmatprep.subr.bf16.mxu0 0
      %1040 = vmatpush2.bf16.msra.mxu0 0
      %1041 = vmatprep.subr.bf16.mxu0 0
      %1042 = vmatpush2.bf16.msra.mxu0 0
      %1043 = vmatprep.subr.bf16.mxu0 0
      %1044 = vmatpush2.bf16.msra.mxu0 0
      %1045 = vmatprep.subr.bf16.mxu0 0
      %1046 = vmatpush2.bf16.msra.mxu0 0
      %1047 = vmatprep.subr.bf16.mxu0 0
      %1048 = vmatpush2.bf16.msra.mxu0 0
      %1049 = vmatprep.subr.bf16.mxu0 0
      %1050 = vmatpush2.bf16.msra.mxu0 0
      %1051 = vmatprep.subr.bf16.mxu0 0
      %1052 = vmatpush2.bf16.msra.mxu0 0
      %1053 = vmatprep.mubr.bf16.mxu0 0
      %1054 = vmatmul.mubr.bf16.gmra.mxu0 %v1019
      %v1055 = vpop.f32.mrf.mxu0
      %v1056 = vadd.f32 %v992, %v1055
      %v1057 = vpop.f32.mrf.mxu0
      %v1058 = vpop.f32.mrf.mxu0
      %v1059 = vadd.f32 %v992, %v1058
      %v1060 = vpop.f32.mrf.mxu0
      %1061 = vdwg.mxu0
      %v1062 = vadd.f32 %v280, %v1056
      %v1063 = vadd.f32 %v281, %v1059
      %1064 = vst.msk [vmem:[%s278] sm:$0xff] %vm284, %v1062
      %1065 = vst.msk [vmem:[%s278 + $0x8] sm:$0xff] %vm284, %v1063
      %p1066 = scmp.lt.s32.totalorder %s18, 1
      %s1067 = scalar_select %p1066, %s18, 1
      %s1068 = smul.addr %s1067, 2
      %s1069 = smul.addr %s1068, 8
      %s1070 = scalar_lea.vmem %s7, %s1069
      // Predicated region
      $region49: #{_lambda_.5} parent=47 // pred_check
        %p1071 = pneg %p188
      $region50: #{_lambda_.5} parent=47 // pred_check_branch
        %1073 = sbr.rel (%p1071) target = $region52
      $region51: #{_lambda_.5} parent=47 // pred_region
        _
      $region52: #{_lambda_.5} parent=47 // pred_fallthru
        _
    $region48: #{_lambda_.5} parent=5 // pred_fallthru
      _
    %p1074 = scmp.le.s32.totalorder 2, %s13
    // Predicated region
    $region53: #{_lambda_.5} parent=5 // pred_check
      %p1075 = pneg %p1074
    $region54: #{_lambda_.5} parent=5 // pred_check_branch
      %1077 = sbr.rel (%p1075) target = $region56
    $region55: #{_lambda_.5} parent=5 // pred_region
      %s1078 = ssub.s32 %s13, 2
      // Predicated region
      $region57: #{_lambda_.5} parent=55 // pred_check
        %p1079 = pneg %p194
      $region58: #{_lambda_.5} parent=55 // pred_check_branch
        %1081 = sbr.rel (%p1079) target = $region60
      $region59: #{_lambda_.5} parent=55 // pred_region
        %p1082 = scmp.lt.s32.totalorder %s19, 1
        %s1083 = scalar_select %p1082, %s19, 1
        %s1084 = smul.addr %s1083, 2
        %s1085 = smul.addr %s1084, 8
        %s1086 = scalar_lea.vmem %s7, %s1085
      $region60: #{_lambda_.5} parent=55 // pred_fallthru
        _
    $region56: #{_lambda_.5} parent=5 // pred_fallthru
      _
  $region6: #{_lambda_.5} parent=0 // loop_footer
    %s17 = sadd.s32 1, %s13
  $region7: #{_lambda_.5} parent=0 // loop_footer_branch
    %12 = sbr.rel target = $region3
  $region8: #{_lambda_.5} parent=0 // loop_exit
    _

</llo_original>
